<compile_context>
chip_gen: v7x
topology: tpu7x:2x2x1
jax: 0.10.0
libtpu: 0.0.40
codegen_flags: <defaults>
</compile_context>

<pallas_src>
from functools import partial

import jax
import jax.numpy as jnp
from jax.experimental import pallas as pl
from jax.experimental.pallas import tpu as pltpu

LN_EPS = 1e-5  # PyTorch nn.LayerNorm default eps


def _transformer_kernel(
    xT_ref,
    w_in, b_in, g_in, be_in,
    w_attn, b_attn,
    w_p1, b_p1, w_p2, b_p2,
    w_f1, b_f1, w_f2, b_f2,
    w_o1h, w_o1p, b_o1, w_o2, b_o2,
    out_ref,
):
    def mm(w_ref, z):
        w = w_ref[...]
        # Cast activations to the (bf16) weight dtype right before the MXU,
        # accumulate in f32.
        return jnp.dot(w, z.astype(w.dtype), preferred_element_type=jnp.float32)

    def ln(z):
        # LayerNorm over the feature axis (axis 0) of a (features, rows) block,
        # without affine.  Variance via E[x^2] - mu^2 saves one full-tile pass.
        mu = jnp.mean(z, axis=0, keepdims=True)
        var = jnp.maximum(jnp.mean(z * z, axis=0, keepdims=True) - mu * mu, 0.0)
        return (z - mu) * jax.lax.rsqrt(var + LN_EPS)

    xT = xT_ref[...]                                        # (d_in, tb) bf16/f32

    # input_layer: Linear -> LayerNorm -> ReLU -> Dropout(identity)
    h = mm(w_in, xT) + b_in[...]                            # (H, tb) f32
    h = jnp.maximum(ln(h) * g_in[...] + be_in[...], 0.0)

    # periodic_layer: Linear -> ReLU -> Linear
    p = jnp.maximum(mm(w_p1, h) + b_p1[...], 0.0)           # (H//2, tb)
    p = mm(w_p2, p) + b_p2[...]

    # MultiheadAttention over seq_len 1: softmax over a single key == 1.0, so
    # attn_out == out_proj(v_proj(h)); both projections fused host-side.
    a = mm(w_attn, h) + b_attn[...]                         # (H, tb)

    # feed_forward: Linear -> ReLU -> Dropout(identity) -> Linear -> LayerNorm
    f = jnp.maximum(mm(w_f1, a) + b_f1[...], 0.0)           # (2H, tb)
    f = ln(mm(w_f2, f) + b_f2[...])                         # LN affine folded into w_o1h/b_o1

    # output_layer on concat([f, p], dim=1) as a split matmul.
    o = jnp.maximum(mm(w_o1h, f) + mm(w_o1p, p) + b_o1[...], 0.0)   # (32, tb)
    # Final Linear(32 -> 1) as a VPU multiply + sublane reduce (w_o2 stored as
    # the (32, 1) column W_out2^T).
    y = jnp.sum(o * w_o2[...], axis=0, keepdims=True) + b_o2[...]   # (1, tb)

    out_ref[...] = y.astype(out_ref.dtype)


@partial(jax.jit, static_argnames=("tb", "compute_dtype"))
def transformer_predictor(x, params, *, tb=2048, compute_dtype=jnp.bfloat16):
    """x: (batch, input_dim) -> (batch, 1) float32.  params: PyTorch-layout dict."""
    n, d_in = x.shape
    H = params["w_in"].shape[0]
    f32 = jnp.float32

    # ---- Row-tile selection -------------------------------------------------
    # Lane-dense multiple of 128.  Choose so medium batches give >= 2 grid
    # steps (v7x has two TensorCores); cap at `tb` (default 2048) and at 8192
    # as a v5e scoped-VMEM guard.
    tb_cap = max(128, (min(int(tb), 8192) // 128) * 128)
    half = pl.cdiv(pl.cdiv(n, 2), 128) * 128
    tb_eff = max(128, min(tb_cap, half))
    num_tiles = pl.cdiv(n, tb_eff)
    n_pad = num_tiles * tb_eff

    # ---- Host-side (in-jit) algebraic fusion, all in f32 --------------------
    # Attention (seq_len 1): out_proj o v_proj fused into one matmul.
    w_attn = params["w_o"].astype(f32) @ params["w_v"].astype(f32)
    b_attn = params["w_o"].astype(f32) @ params["b_v"].astype(f32) \
        + params["b_o"].astype(f32)

    # Feed-forward LayerNorm affine folded into the output layer.
    g_ff = params["ln2_g"].astype(f32)                       # (H, 1)
    be_ff = params["ln2_b"].astype(f32)
    w_o1 = params["w_o1"].astype(f32)                        # (32, H + H//2)
    w_o1h = w_o1[:, :H] * g_ff.T
    w_o1p = w_o1[:, H:]
    b_o1 = params["b_o1"].astype(f32) + w_o1[:, :H] @ be_ff

    cd = compute_dtype
    weights = [
        params["w_in"].astype(cd), params["b_in"].astype(f32),
        params["ln1_g"].astype(f32), params["ln1_b"].astype(f32),
        w_attn.astype(cd), b_attn,
        params["w_p1"].astype(cd), params["b_p1"].astype(f32),
        params["w_p2"].astype(cd), params["b_p2"].astype(f32),
        params["w_f1"].astype(cd), params["b_f1"].astype(f32),
        params["w_f2"].astype(cd), params["b_f2"].astype(f32),
        w_o1h.astype(cd), w_o1p.astype(cd), b_o1,
        params["w_o2"].astype(f32).T,                        # (32, 1) column
        params["b_o2"].astype(f32),                          # (1, 1)
    ]

    # ---- Input: fused cast + pad + transpose (batch on the lane axis) -------
    xT = jnp.pad(x.astype(cd), ((0, n_pad - n), (0, 0))).T   # (d_in, n_pad)

    in_specs = [pl.BlockSpec((d_in, tb_eff), lambda i: (0, i))]
    for w in weights:
        # Small, grid-invariant operands: same (full) block every step, so the
        # pipeline fetches them once and they stay VMEM-resident.
        in_specs.append(pl.BlockSpec(w.shape, lambda i: (0, 0)))

    # ---- Cost estimate (scheduling hint) -------------------------------------
    Hh = H // 2
    macs = (H * d_in + H * H + Hh * H + Hh * Hh
            + 2 * H * H + 2 * H * H + 32 * (H + Hh) + 32)
    weight_bytes = sum(int(w.size) * w.dtype.itemsize for w in weights)
    cost = pl.CostEstimate(
        flops=2 * macs * n_pad,
        transcendentals=2 * n_pad,                 # two rsqrt per column
        bytes_accessed=int(xT.size) * xT.dtype.itemsize + n_pad * 4 + weight_bytes,
    )

    out = pl.pallas_call(
        _transformer_kernel,
        out_shape=jax.ShapeDtypeStruct((1, n_pad), jnp.float32),
        grid_spec=pltpu.PrefetchScalarGridSpec(
            num_scalar_prefetch=0,
            grid=(num_tiles,),
            in_specs=in_specs,
            out_specs=pl.BlockSpec((1, tb_eff), lambda i: (0, i)),
        ),
        compiler_params=pltpu.CompilerParams(
            dimension_semantics=("parallel",)),
        cost_estimate=cost,
    )(xT, *weights)

    # Lane-dense (1, n_pad) slab -> (n, 1), dropping the pad columns.
    return out.reshape(n_pad, 1)[:n]


def init_params(key, input_dim, hidden_dim):
    """Parameters in native PyTorch layout: W (out, in), b (out, 1)."""
    H = hidden_dim
    Hh = H // 2
    F = 2 * H
    ks = jax.random.split(key, 11)

    def lin(k, fan_in, fan_out):
        kw, kb = jax.random.split(k)
        bound = 1.0 / jnp.sqrt(jnp.float32(fan_in))
        w = jax.random.uniform(kw, (fan_out, fan_in), jnp.float32, -bound, bound)
        b = jax.random.uniform(kb, (fan_out, 1), jnp.float32, -bound, bound)
        return w, b

    w_in, b_in = lin(ks[0], input_dim, H)
    w_q, b_q = lin(ks[1], H, H)
    w_k, b_k = lin(ks[2], H, H)
    w_v, b_v = lin(ks[3], H, H)
    w_o, b_o = lin(ks[4], H, H)
    w_p1, b_p1 = lin(ks[5], H, Hh)
    w_p2, b_p2 = lin(ks[6], Hh, Hh)
    w_f1, b_f1 = lin(ks[7], H, F)
    w_f2, b_f2 = lin(ks[8], F, H)
    w_o1, b_o1 = lin(ks[9], H + Hh, 32)
    w_o2, b_o2 = lin(ks[10], 32, 1)

    return dict(
        w_in=w_in, b_in=b_in,
        ln1_g=jnp.ones((H, 1), jnp.float32), ln1_b=jnp.zeros((H, 1), jnp.float32),
        w_q=w_q, b_q=b_q, w_k=w_k, b_k=b_k, w_v=w_v, b_v=b_v, w_o=w_o, b_o=b_o,
        w_p1=w_p1, b_p1=b_p1, w_p2=w_p2, b_p2=b_p2,
        w_f1=w_f1, b_f1=b_f1, w_f2=w_f2, b_f2=b_f2,
        ln2_g=jnp.ones((H, 1), jnp.float32), ln2_b=jnp.zeros((H, 1), jnp.float32),
        w_o1=w_o1, b_o1=b_o1, w_o2=w_o2, b_o2=b_o2,
    )


def reference_forward(x, params, num_heads=4):
    """Pure-JAX f32 reference with the FULL multi-head attention math (seq_len=1)."""
    def lin(z, w, b):          # PyTorch layout: W (out, in), b (out, 1)
        return z @ w.T + b.T

    def ln(z, g, b):
        mu = jnp.mean(z, axis=-1, keepdims=True)
        var = jnp.mean((z - mu) ** 2, axis=-1, keepdims=True)
        return (z - mu) * jax.lax.rsqrt(var + LN_EPS) * g.T + b.T

    n = x.shape[0]
    h = jnp.maximum(ln(lin(x, params["w_in"], params["b_in"]),
                       params["ln1_g"], params["ln1_b"]), 0.0)

    p = jnp.maximum(lin(h, params["w_p1"], params["b_p1"]), 0.0)
    p = lin(p, params["w_p2"], params["b_p2"])

    H = h.shape[1]
    dh = H // num_heads
    q = lin(h, params["w_q"], params["b_q"])
    k = lin(h, params["w_k"], params["b_k"])
    v = lin(h, params["w_v"], params["b_v"])
    qh = q.reshape(n, num_heads, dh)
    kh = k.reshape(n, num_heads, dh)
    vh = v.reshape(n, num_heads, dh)
    scores = jnp.sum(qh * kh, axis=-1, keepdims=True) / jnp.sqrt(jnp.float32(dh))
    attn_w = jax.nn.softmax(scores, axis=-1)          # (n, heads, 1) == 1.0
    attn = (attn_w * vh).reshape(n, H)
    a = lin(attn, params["w_o"], params["b_o"])

    f = jnp.maximum(lin(a, params["w_f1"], params["b_f1"]), 0.0)
    f = ln(lin(f, params["w_f2"], params["b_f2"]),
           params["ln2_g"], params["ln2_b"])

    cat = jnp.concatenate([f, p], axis=1)
    o = jnp.maximum(cat @ params["w_o1"].T + params["b_o1"].T, 0.0)
    return o @ params["w_o2"].T + params["b_o2"].T


if __name__ == "__main__":
    INPUT_DIM = 16
    HIDDEN_DIM = 32   # small test size; num_heads=4 divides it
    BATCH = 8

    key = jax.random.PRNGKey(0)
    kx, kp, kx2 = jax.random.split(key, 3)
    x = jax.random.normal(kx, (BATCH, INPUT_DIM), jnp.float32)
    params = init_params(kp, INPUT_DIM, HIDDEN_DIM)
    ref = reference_forward(x, params)

    # f32 MXU path: tight check of all the algebraic fusions against the full
    # multi-head-attention f32 reference.
    out_f32 = jax.block_until_ready(
        transformer_predictor(x, params, compute_dtype=jnp.float32))
    assert out_f32.shape == (BATCH, 1)
    assert jnp.allclose(out_f32, ref, atol=5e-4, rtol=5e-4), (out_f32, ref)

    # bf16 MXU path (default): matches the f32 reference to bf16 precision.
    out_bf16 = jax.block_until_ready(transformer_predictor(x, params))
    assert out_bf16.shape == (BATCH, 1)
    assert jnp.allclose(out_bf16, ref, atol=5e-2, rtol=5e-2), (out_bf16, ref)

    # Multi-tile + padding path: batch not a multiple of the tile; the default
    # heuristic picks 2 tiles (v7x megacore), the explicit tb=128 gives 3.
    x2 = jax.random.normal(kx2, (300, INPUT_DIM), jnp.float32)
    ref2 = reference_forward(x2, params)
    out2a = jax.block_until_ready(transformer_predictor(x2, params))
    out2b = jax.block_until_ready(transformer_predictor(x2, params, tb=128))
    assert out2a.shape == (300, 1) and out2b.shape == (300, 1)
    assert jnp.allclose(out2a, ref2, atol=5e-2, rtol=5e-2)
    assert jnp.allclose(out2b, ref2, atol=5e-2, rtol=5e-2)

    # TODO(synk): Dropout(p=0.1) layers are identity here (eval-mode forward);
    # training-mode stochastic dropout is not implemented.
    print("KERNEL_OK")
</pallas_src>

<mosaic_0001>
module attributes {stable_mosaic.version = 11 : i64} {
  func.func @_transformer_kernel(%arg0: i32, %arg1: memref<16x128xf32, #tpu.memory_space<vmem>>, %arg2: memref<32x16xf32, #tpu.memory_space<vmem>>, %arg3: memref<32x1xf32, #tpu.memory_space<vmem>>, %arg4: memref<32x1xf32, #tpu.memory_space<vmem>>, %arg5: memref<32x1xf32, #tpu.memory_space<vmem>>, %arg6: memref<32x32xf32, #tpu.memory_space<vmem>>, %arg7: memref<32x1xf32, #tpu.memory_space<vmem>>, %arg8: memref<16x32xf32, #tpu.memory_space<vmem>>, %arg9: memref<16x1xf32, #tpu.memory_space<vmem>>, %arg10: memref<16x16xf32, #tpu.memory_space<vmem>>, %arg11: memref<16x1xf32, #tpu.memory_space<vmem>>, %arg12: memref<64x32xf32, #tpu.memory_space<vmem>>, %arg13: memref<64x1xf32, #tpu.memory_space<vmem>>, %arg14: memref<32x64xf32, #tpu.memory_space<vmem>>, %arg15: memref<32x1xf32, #tpu.memory_space<vmem>>, %arg16: memref<32x32xf32, #tpu.memory_space<vmem>>, %arg17: memref<32x16xf32, #tpu.memory_space<vmem>>, %arg18: memref<32x1xf32, #tpu.memory_space<vmem>>, %arg19: memref<32x1xf32, #tpu.memory_space<vmem>>, %arg20: memref<1x1xf32, #tpu.memory_space<vmem>>, %arg21: memref<1x128xf32, #tpu.memory_space<vmem>>) attributes {dimension_semantics = [#tpu.dimension_semantics<parallel>], iteration_bounds = array<i64: 1>, scalar_prefetch = 0 : i64, scratch_operands = 0 : i64, tpu.core_type = #tpu.core_type<tc>, window_params = [{transform_indices = @transform_0, window_bounds = array<i64: 16, 128>}, {pipeline_mode = #tpu.pipeline_mode<synchronous>, transform_indices = @transform_1, window_bounds = array<i64: 32, 16>}, {pipeline_mode = #tpu.pipeline_mode<synchronous>, transform_indices = @transform_2, window_bounds = array<i64: 32, 1>}, {pipeline_mode = #tpu.pipeline_mode<synchronous>, transform_indices = @transform_3, window_bounds = array<i64: 32, 1>}, {pipeline_mode = #tpu.pipeline_mode<synchronous>, transform_indices = @transform_4, window_bounds = array<i64: 32, 1>}, {pipeline_mode = #tpu.pipeline_mode<synchronous>, transform_indices = @transform_5, window_bounds = array<i64: 32, 32>}, {pipeline_mode = #tpu.pipeline_mode<synchronous>, transform_indices = @transform_6, window_bounds = array<i64: 32, 1>}, {pipeline_mode = #tpu.pipeline_mode<synchronous>, transform_indices = @transform_7, window_bounds = array<i64: 16, 32>}, {pipeline_mode = #tpu.pipeline_mode<synchronous>, transform_indices = @transform_8, window_bounds = array<i64: 16, 1>}, {pipeline_mode = #tpu.pipeline_mode<synchronous>, transform_indices = @transform_9, window_bounds = array<i64: 16, 16>}, {pipeline_mode = #tpu.pipeline_mode<synchronous>, transform_indices = @transform_10, window_bounds = array<i64: 16, 1>}, {pipeline_mode = #tpu.pipeline_mode<synchronous>, transform_indices = @transform_11, window_bounds = array<i64: 64, 32>}, {pipeline_mode = #tpu.pipeline_mode<synchronous>, transform_indices = @transform_12, window_bounds = array<i64: 64, 1>}, {pipeline_mode = #tpu.pipeline_mode<synchronous>, transform_indices = @transform_13, window_bounds = array<i64: 32, 64>}, {pipeline_mode = #tpu.pipeline_mode<synchronous>, transform_indices = @transform_14, window_bounds = array<i64: 32, 1>}, {pipeline_mode = #tpu.pipeline_mode<synchronous>, transform_indices = @transform_15, window_bounds = array<i64: 32, 32>}, {pipeline_mode = #tpu.pipeline_mode<synchronous>, transform_indices = @transform_16, window_bounds = array<i64: 32, 16>}, {pipeline_mode = #tpu.pipeline_mode<synchronous>, transform_indices = @transform_17, window_bounds = array<i64: 32, 1>}, {pipeline_mode = #tpu.pipeline_mode<synchronous>, transform_indices = @transform_18, window_bounds = array<i64: 32, 1>}, {pipeline_mode = #tpu.pipeline_mode<synchronous>, transform_indices = @transform_19, window_bounds = array<i64: 1, 1>}, {transform_indices = @transform_20, window_bounds = array<i64: 1, 128>}]} {
    %c0 = arith.constant 0 : index
    %c0_0 = arith.constant 0 : index
    %0 = vector.load %arg1[%c0, %c0_0] : memref<16x128xf32, #tpu.memory_space<vmem>>, vector<16x128xf32>
    %c0_1 = arith.constant 0 : index
    %c0_2 = arith.constant 0 : index
    %1 = vector.load %arg2[%c0_1, %c0_2] : memref<32x16xf32, #tpu.memory_space<vmem>>, vector<32x16xf32>
    %cst = arith.constant dense<0.000000e+00> : vector<32x128xf32>
    %2 = tpu.matmul %1, %0, %cst {dimension_numbers = #tpu.dot_dimension_numbers<[1], [0], [0], [1], [0, 0, 1, 1], [], []>} : vector<32x16xf32>, vector<16x128xf32>, vector<32x128xf32> -> vector<32x128xf32>
    %c0_3 = arith.constant 0 : index
    %c0_4 = arith.constant 0 : index
    %3 = vector.load %arg3[%c0_3, %c0_4] : memref<32x1xf32, #tpu.memory_space<vmem>>, vector<32x1xf32>
    %4 = vector.broadcast %3 : vector<32x1xf32> to vector<32x128xf32>
    %5 = arith.addf %2, %4 : vector<32x128xf32>
    %cst_5 = arith.constant dense<0.000000e+00> : vector<128xf32>
    %6 = vector.multi_reduction <add>, %5, %cst_5 [0] : vector<32x128xf32> to vector<128xf32>
    %7 = vector.shape_cast %6 : vector<128xf32> to vector<1x128xf32>
    %cst_6 = arith.constant 3.200000e+01 : f32
    %8 = vector.broadcast %cst_6 : f32 to vector<1x128xf32>
    %9 = arith.divf %7, %8 : vector<1x128xf32>
    %10 = arith.mulf %5, %5 : vector<32x128xf32>
    %cst_7 = arith.constant dense<0.000000e+00> : vector<128xf32>
    %11 = vector.multi_reduction <add>, %10, %cst_7 [0] : vector<32x128xf32> to vector<128xf32>
    %12 = vector.shape_cast %11 : vector<128xf32> to vector<1x128xf32>
    %cst_8 = arith.constant 3.200000e+01 : f32
    %13 = vector.broadcast %cst_8 : f32 to vector<1x128xf32>
    %14 = arith.divf %12, %13 : vector<1x128xf32>
    %15 = arith.mulf %9, %9 : vector<1x128xf32>
    %16 = arith.subf %14, %15 : vector<1x128xf32>
    %cst_9 = arith.constant 0.000000e+00 : f32
    %17 = vector.broadcast %cst_9 : f32 to vector<1x128xf32>
    %18 = arith.maximumf %16, %17 : vector<1x128xf32>
    %19 = vector.broadcast %9 : vector<1x128xf32> to vector<32x128xf32>
    %20 = arith.subf %5, %19 : vector<32x128xf32>
    %cst_10 = arith.constant 9.99999974E-6 : f32
    %21 = vector.broadcast %cst_10 : f32 to vector<1x128xf32>
    %22 = arith.addf %18, %21 : vector<1x128xf32>
    %23 = math.rsqrt %22 : vector<1x128xf32>
    %24 = vector.broadcast %23 : vector<1x128xf32> to vector<32x128xf32>
    %25 = arith.mulf %20, %24 : vector<32x128xf32>
    %c0_11 = arith.constant 0 : index
    %c0_12 = arith.constant 0 : index
    %26 = vector.load %arg4[%c0_11, %c0_12] : memref<32x1xf32, #tpu.memory_space<vmem>>, vector<32x1xf32>
    %27 = vector.broadcast %26 : vector<32x1xf32> to vector<32x128xf32>
    %28 = arith.mulf %25, %27 : vector<32x128xf32>
    %c0_13 = arith.constant 0 : index
    %c0_14 = arith.constant 0 : index
    %29 = vector.load %arg5[%c0_13, %c0_14] : memref<32x1xf32, #tpu.memory_space<vmem>>, vector<32x1xf32>
    %30 = vector.broadcast %29 : vector<32x1xf32> to vector<32x128xf32>
    %31 = arith.addf %28, %30 : vector<32x128xf32>
    %cst_15 = arith.constant 0.000000e+00 : f32
    %32 = vector.broadcast %cst_15 : f32 to vector<32x128xf32>
    %33 = arith.maximumf %31, %32 : vector<32x128xf32>
    %c0_16 = arith.constant 0 : index
    %c0_17 = arith.constant 0 : index
    %34 = vector.load %arg8[%c0_16, %c0_17] : memref<16x32xf32, #tpu.memory_space<vmem>>, vector<16x32xf32>
    %cst_18 = arith.constant dense<0.000000e+00> : vector<16x128xf32>
    %35 = tpu.matmul %34, %33, %cst_18 {dimension_numbers = #tpu.dot_dimension_numbers<[1], [0], [0], [1], [0, 0, 1, 1], [], []>} : vector<16x32xf32>, vector<32x128xf32>, vector<16x128xf32> -> vector<16x128xf32>
    %c0_19 = arith.constant 0 : index
    %c0_20 = arith.constant 0 : index
    %36 = vector.load %arg9[%c0_19, %c0_20] : memref<16x1xf32, #tpu.memory_space<vmem>>, vector<16x1xf32>
    %37 = vector.broadcast %36 : vector<16x1xf32> to vector<16x128xf32>
    %38 = arith.addf %35, %37 : vector<16x128xf32>
    %cst_21 = arith.constant 0.000000e+00 : f32
    %39 = vector.broadcast %cst_21 : f32 to vector<16x128xf32>
    %40 = arith.maximumf %38, %39 : vector<16x128xf32>
    %c0_22 = arith.constant 0 : index
    %c0_23 = arith.constant 0 : index
    %41 = vector.load %arg10[%c0_22, %c0_23] : memref<16x16xf32, #tpu.memory_space<vmem>>, vector<16x16xf32>
    %cst_24 = arith.constant dense<0.000000e+00> : vector<16x128xf32>
    %42 = tpu.matmul %41, %40, %cst_24 {dimension_numbers = #tpu.dot_dimension_numbers<[1], [0], [0], [1], [0, 0, 1, 1], [], []>} : vector<16x16xf32>, vector<16x128xf32>, vector<16x128xf32> -> vector<16x128xf32>
    %c0_25 = arith.constant 0 : index
    %c0_26 = arith.constant 0 : index
    %43 = vector.load %arg11[%c0_25, %c0_26] : memref<16x1xf32, #tpu.memory_space<vmem>>, vector<16x1xf32>
    %44 = vector.broadcast %43 : vector<16x1xf32> to vector<16x128xf32>
    %45 = arith.addf %42, %44 : vector<16x128xf32>
    %c0_27 = arith.constant 0 : index
    %c0_28 = arith.constant 0 : index
    %46 = vector.load %arg6[%c0_27, %c0_28] : memref<32x32xf32, #tpu.memory_space<vmem>>, vector<32x32xf32>
    %cst_29 = arith.constant dense<0.000000e+00> : vector<32x128xf32>
    %47 = tpu.matmul %46, %33, %cst_29 {dimension_numbers = #tpu.dot_dimension_numbers<[1], [0], [0], [1], [0, 0, 1, 1], [], []>} : vector<32x32xf32>, vector<32x128xf32>, vector<32x128xf32> -> vector<32x128xf32>
    %c0_30 = arith.constant 0 : index
    %c0_31 = arith.constant 0 : index
    %48 = vector.load %arg7[%c0_30, %c0_31] : memref<32x1xf32, #tpu.memory_space<vmem>>, vector<32x1xf32>
    %49 = vector.broadcast %48 : vector<32x1xf32> to vector<32x128xf32>
    %50 = arith.addf %47, %49 : vector<32x128xf32>
    %c0_32 = arith.constant 0 : index
    %c0_33 = arith.constant 0 : index
    %51 = vector.load %arg12[%c0_32, %c0_33] : memref<64x32xf32, #tpu.memory_space<vmem>>, vector<64x32xf32>
    %cst_34 = arith.constant dense<0.000000e+00> : vector<64x128xf32>
    %52 = tpu.matmul %51, %50, %cst_34 {dimension_numbers = #tpu.dot_dimension_numbers<[1], [0], [0], [1], [0, 0, 1, 1], [], []>} : vector<64x32xf32>, vector<32x128xf32>, vector<64x128xf32> -> vector<64x128xf32>
    %c0_35 = arith.constant 0 : index
    %c0_36 = arith.constant 0 : index
    %53 = vector.load %arg13[%c0_35, %c0_36] : memref<64x1xf32, #tpu.memory_space<vmem>>, vector<64x1xf32>
    %54 = vector.broadcast %53 : vector<64x1xf32> to vector<64x128xf32>
    %55 = arith.addf %52, %54 : vector<64x128xf32>
    %cst_37 = arith.constant 0.000000e+00 : f32
    %56 = vector.broadcast %cst_37 : f32 to vector<64x128xf32>
    %57 = arith.maximumf %55, %56 : vector<64x128xf32>
    %c0_38 = arith.constant 0 : index
    %c0_39 = arith.constant 0 : index
    %58 = vector.load %arg14[%c0_38, %c0_39] : memref<32x64xf32, #tpu.memory_space<vmem>>, vector<32x64xf32>
    %cst_40 = arith.constant dense<0.000000e+00> : vector<32x128xf32>
    %59 = tpu.matmul %58, %57, %cst_40 {dimension_numbers = #tpu.dot_dimension_numbers<[1], [0], [0], [1], [0, 0, 1, 1], [], []>} : vector<32x64xf32>, vector<64x128xf32>, vector<32x128xf32> -> vector<32x128xf32>
    %c0_41 = arith.constant 0 : index
    %c0_42 = arith.constant 0 : index
    %60 = vector.load %arg15[%c0_41, %c0_42] : memref<32x1xf32, #tpu.memory_space<vmem>>, vector<32x1xf32>
    %61 = vector.broadcast %60 : vector<32x1xf32> to vector<32x128xf32>
    %62 = arith.addf %59, %61 : vector<32x128xf32>
    %cst_43 = arith.constant dense<0.000000e+00> : vector<128xf32>
    %63 = vector.multi_reduction <add>, %62, %cst_43 [0] : vector<32x128xf32> to vector<128xf32>
    %64 = vector.shape_cast %63 : vector<128xf32> to vector<1x128xf32>
    %cst_44 = arith.constant 3.200000e+01 : f32
    %65 = vector.broadcast %cst_44 : f32 to vector<1x128xf32>
    %66 = arith.divf %64, %65 : vector<1x128xf32>
    %67 = arith.mulf %62, %62 : vector<32x128xf32>
    %cst_45 = arith.constant dense<0.000000e+00> : vector<128xf32>
    %68 = vector.multi_reduction <add>, %67, %cst_45 [0] : vector<32x128xf32> to vector<128xf32>
    %69 = vector.shape_cast %68 : vector<128xf32> to vector<1x128xf32>
    %cst_46 = arith.constant 3.200000e+01 : f32
    %70 = vector.broadcast %cst_46 : f32 to vector<1x128xf32>
    %71 = arith.divf %69, %70 : vector<1x128xf32>
    %72 = arith.mulf %66, %66 : vector<1x128xf32>
    %73 = arith.subf %71, %72 : vector<1x128xf32>
    %cst_47 = arith.constant 0.000000e+00 : f32
    %74 = vector.broadcast %cst_47 : f32 to vector<1x128xf32>
    %75 = arith.maximumf %73, %74 : vector<1x128xf32>
    %76 = vector.broadcast %66 : vector<1x128xf32> to vector<32x128xf32>
    %77 = arith.subf %62, %76 : vector<32x128xf32>
    %cst_48 = arith.constant 9.99999974E-6 : f32
    %78 = vector.broadcast %cst_48 : f32 to vector<1x128xf32>
    %79 = arith.addf %75, %78 : vector<1x128xf32>
    %80 = math.rsqrt %79 : vector<1x128xf32>
    %81 = vector.broadcast %80 : vector<1x128xf32> to vector<32x128xf32>
    %82 = arith.mulf %77, %81 : vector<32x128xf32>
    %c0_49 = arith.constant 0 : index
    %c0_50 = arith.constant 0 : index
    %83 = vector.load %arg16[%c0_49, %c0_50] : memref<32x32xf32, #tpu.memory_space<vmem>>, vector<32x32xf32>
    %cst_51 = arith.constant dense<0.000000e+00> : vector<32x128xf32>
    %84 = tpu.matmul %83, %82, %cst_51 {dimension_numbers = #tpu.dot_dimension_numbers<[1], [0], [0], [1], [0, 0, 1, 1], [], []>} : vector<32x32xf32>, vector<32x128xf32>, vector<32x128xf32> -> vector<32x128xf32>
    %c0_52 = arith.constant 0 : index
    %c0_53 = arith.constant 0 : index
    %85 = vector.load %arg17[%c0_52, %c0_53] : memref<32x16xf32, #tpu.memory_space<vmem>>, vector<32x16xf32>
    %cst_54 = arith.constant dense<0.000000e+00> : vector<32x128xf32>
    %86 = tpu.matmul %85, %45, %cst_54 {dimension_numbers = #tpu.dot_dimension_numbers<[1], [0], [0], [1], [0, 0, 1, 1], [], []>} : vector<32x16xf32>, vector<16x128xf32>, vector<32x128xf32> -> vector<32x128xf32>
    %87 = arith.addf %84, %86 : vector<32x128xf32>
    %c0_55 = arith.constant 0 : index
    %c0_56 = arith.constant 0 : index
    %88 = vector.load %arg18[%c0_55, %c0_56] : memref<32x1xf32, #tpu.memory_space<vmem>>, vector<32x1xf32>
    %89 = vector.broadcast %88 : vector<32x1xf32> to vector<32x128xf32>
    %90 = arith.addf %87, %89 : vector<32x128xf32>
    %cst_57 = arith.constant 0.000000e+00 : f32
    %91 = vector.broadcast %cst_57 : f32 to vector<32x128xf32>
    %92 = arith.maximumf %90, %91 : vector<32x128xf32>
    %c0_58 = arith.constant 0 : index
    %c0_59 = arith.constant 0 : index
    %93 = vector.load %arg19[%c0_58, %c0_59] : memref<32x1xf32, #tpu.memory_space<vmem>>, vector<32x1xf32>
    %94 = vector.broadcast %93 : vector<32x1xf32> to vector<32x128xf32>
    %95 = arith.mulf %92, %94 : vector<32x128xf32>
    %cst_60 = arith.constant dense<0.000000e+00> : vector<128xf32>
    %96 = vector.multi_reduction <add>, %95, %cst_60 [0] : vector<32x128xf32> to vector<128xf32>
    %97 = vector.shape_cast %96 : vector<128xf32> to vector<1x128xf32>
    %c0_61 = arith.constant 0 : index
    %c0_62 = arith.constant 0 : index
    %98 = vector.load %arg20[%c0_61, %c0_62] : memref<1x1xf32, #tpu.memory_space<vmem>>, vector<1x1xf32>
    %99 = vector.broadcast %98 : vector<1x1xf32> to vector<1x128xf32>
    %100 = arith.addf %97, %99 : vector<1x128xf32>
    %c0_63 = arith.constant 0 : index
    %c0_64 = arith.constant 0 : index
    %101 = vector.load %arg21[%c0_63, %c0_64] : memref<1x128xf32, #tpu.memory_space<vmem>>, vector<1x128xf32>
    tpu.vector_store %arg21[%c0_63, %c0_64], %100 {strides = array<i32>} : memref<1x128xf32, #tpu.memory_space<vmem>>, vector<1x128xf32>,
    return
  }
  func.func @transform_0(%arg0: i32) -> (i32, i32) {
    %c0_i32 = arith.constant 0 : i32
    %c0_i32_0 = arith.constant 0 : i32
    return %c0_i32, %arg0 : i32, i32
  }
  func.func @transform_1(%arg0: i32) -> (i32, i32) {
    %c0_i32 = arith.constant 0 : i32
    %c0_i32_0 = arith.constant 0 : i32
    %c0_i32_1 = arith.constant 0 : i32
    return %c0_i32, %c0_i32_0 : i32, i32
  }
  func.func @transform_2(%arg0: i32) -> (i32, i32) {
    %c0_i32 = arith.constant 0 : i32
    %c0_i32_0 = arith.constant 0 : i32
    %c0_i32_1 = arith.constant 0 : i32
    return %c0_i32, %c0_i32_0 : i32, i32
  }
  func.func @transform_3(%arg0: i32) -> (i32, i32) {
    %c0_i32 = arith.constant 0 : i32
    %c0_i32_0 = arith.constant 0 : i32
    %c0_i32_1 = arith.constant 0 : i32
    return %c0_i32, %c0_i32_0 : i32, i32
  }
  func.func @transform_4(%arg0: i32) -> (i32, i32) {
    %c0_i32 = arith.constant 0 : i32
    %c0_i32_0 = arith.constant 0 : i32
    %c0_i32_1 = arith.constant 0 : i32
    return %c0_i32, %c0_i32_0 : i32, i32
  }
  func.func @transform_5(%arg0: i32) -> (i32, i32) {
    %c0_i32 = arith.constant 0 : i32
    %c0_i32_0 = arith.constant 0 : i32
    %c0_i32_1 = arith.constant 0 : i32
    return %c0_i32, %c0_i32_0 : i32, i32
  }
  func.func @transform_6(%arg0: i32) -> (i32, i32) {
    %c0_i32 = arith.constant 0 : i32
    %c0_i32_0 = arith.constant 0 : i32
    %c0_i32_1 = arith.constant 0 : i32
    return %c0_i32, %c0_i32_0 : i32, i32
  }
  func.func @transform_7(%arg0: i32) -> (i32, i32) {
    %c0_i32 = arith.constant 0 : i32
    %c0_i32_0 = arith.constant 0 : i32
    %c0_i32_1 = arith.constant 0 : i32
    return %c0_i32, %c0_i32_0 : i32, i32
  }
  func.func @transform_8(%arg0: i32) -> (i32, i32) {
    %c0_i32 = arith.constant 0 : i32
    %c0_i32_0 = arith.constant 0 : i32
    %c0_i32_1 = arith.constant 0 : i32
    return %c0_i32, %c0_i32_0 : i32, i32
  }
  func.func @transform_9(%arg0: i32) -> (i32, i32) {
    %c0_i32 = arith.constant 0 : i32
    %c0_i32_0 = arith.constant 0 : i32
    %c0_i32_1 = arith.constant 0 : i32
    return %c0_i32, %c0_i32_0 : i32, i32
  }
  func.func @transform_10(%arg0: i32) -> (i32, i32) {
    %c0_i32 = arith.constant 0 : i32
    %c0_i32_0 = arith.constant 0 : i32
    %c0_i32_1 = arith.constant 0 : i32
    return %c0_i32, %c0_i32_0 : i32, i32
  }
  func.func @transform_11(%arg0: i32) -> (i32, i32) {
    %c0_i32 = arith.constant 0 : i32
    %c0_i32_0 = arith.constant 0 : i32
    %c0_i32_1 = arith.constant 0 : i32
    return %c0_i32, %c0_i32_0 : i32, i32
  }
  func.func @transform_12(%arg0: i32) -> (i32, i32) {
    %c0_i32 = arith.constant 0 : i32
    %c0_i32_0 = arith.constant 0 : i32
    %c0_i32_1 = arith.constant 0 : i32
    return %c0_i32, %c0_i32_0 : i32, i32
  }
  func.func @transform_13(%arg0: i32) -> (i32, i32) {
    %c0_i32 = arith.constant 0 : i32
    %c0_i32_0 = arith.constant 0 : i32
    %c0_i32_1 = arith.constant 0 : i32
    return %c0_i32, %c0_i32_0 : i32, i32
  }
  func.func @transform_14(%arg0: i32) -> (i32, i32) {
    %c0_i32 = arith.constant 0 : i32
    %c0_i32_0 = arith.constant 0 : i32
    %c0_i32_1 = arith.constant 0 : i32
    return %c0_i32, %c0_i32_0 : i32, i32
  }
  func.func @transform_15(%arg0: i32) -> (i32, i32) {
    %c0_i32 = arith.constant 0 : i32
    %c0_i32_0 = arith.constant 0 : i32
    %c0_i32_1 = arith.constant 0 : i32
    return %c0_i32, %c0_i32_0 : i32, i32
  }
  func.func @transform_16(%arg0: i32) -> (i32, i32) {
    %c0_i32 = arith.constant 0 : i32
    %c0_i32_0 = arith.constant 0 : i32
    %c0_i32_1 = arith.constant 0 : i32
    return %c0_i32, %c0_i32_0 : i32, i32
  }
  func.func @transform_17(%arg0: i32) -> (i32, i32) {
    %c0_i32 = arith.constant 0 : i32
    %c0_i32_0 = arith.constant 0 : i32
    %c0_i32_1 = arith.constant 0 : i32
    return %c0_i32, %c0_i32_0 : i32, i32
  }
  func.func @transform_18(%arg0: i32) -> (i32, i32) {
    %c0_i32 = arith.constant 0 : i32
    %c0_i32_0 = arith.constant 0 : i32
    %c0_i32_1 = arith.constant 0 : i32
    return %c0_i32, %c0_i32_0 : i32, i32
  }
  func.func @transform_19(%arg0: i32) -> (i32, i32) {
    %c0_i32 = arith.constant 0 : i32
    %c0_i32_0 = arith.constant 0 : i32
    %c0_i32_1 = arith.constant 0 : i32
    return %c0_i32, %c0_i32_0 : i32, i32
  }
  func.func @transform_20(%arg0: i32) -> (i32, i32) {
    %c0_i32 = arith.constant 0 : i32
    %c0_i32_0 = arith.constant 0 : i32
    return %c0_i32, %arg0 : i32, i32
  }
}

</mosaic_0001>

<llo_original>
// kernel: transformer_predictor.1
$region0: #{transformer_predictor.1}
  #allocation0 [shape = 'u32[]', space=smem, size = 0x4, offset = 0x4, fixed_abs, tag = 'smem constant byte address 0x4 - core index']
  #allocation1 [shape = 'u32[144,128]{1,0:T(1,128)}', space=vmem, size = 0x12000, scoped, tag = 'internal scratch']
  #allocation2 [shape = 'f32[1,1]{1,0:T(1,128)S(1)}', space=vmem, size = 0x200, scoped, tag = 'scoped memory for transformer_predictor.1']
  %s0 = inlined_call_operand.vmem [shape: f32[16,128], index: 0, kind: input, shape index: {}]
  %s1 = inlined_call_operand.vmem [shape: f32[32,16], index: 1, kind: input, shape index: {}]
  %s2 = inlined_call_operand.vmem [shape: f32[32,1], index: 2, kind: input, shape index: {}]
  %s3 = inlined_call_operand.vmem [shape: f32[32,1], index: 3, kind: input, shape index: {}]
  %s4 = inlined_call_operand.vmem [shape: f32[32,1], index: 4, kind: input, shape index: {}]
  %s5 = inlined_call_operand.vmem [shape: f32[32,32], index: 5, kind: input, shape index: {}]
  %s6 = inlined_call_operand.vmem [shape: f32[32,1], index: 6, kind: input, shape index: {}]
  %s7 = inlined_call_operand.vmem [shape: f32[16,32], index: 7, kind: input, shape index: {}]
  %s8 = inlined_call_operand.vmem [shape: f32[16,1], index: 8, kind: input, shape index: {}]
  %s9 = inlined_call_operand.vmem [shape: f32[16,16], index: 9, kind: input, shape index: {}]
  %s10 = inlined_call_operand.vmem [shape: f32[16,1], index: 10, kind: input, shape index: {}]
  %s11 = inlined_call_operand.vmem [shape: f32[64,32], index: 11, kind: input, shape index: {}]
  %s12 = inlined_call_operand.vmem [shape: f32[64,1], index: 12, kind: input, shape index: {}]
  %s13 = inlined_call_operand.vmem [shape: f32[32,64], index: 13, kind: input, shape index: {}]
  %s14 = inlined_call_operand.vmem [shape: f32[32,1], index: 14, kind: input, shape index: {}]
  %s15 = inlined_call_operand.vmem [shape: f32[32,32], index: 15, kind: input, shape index: {}]
  %s16 = inlined_call_operand.vmem [shape: f32[32,16], index: 16, kind: input, shape index: {}]
  %s17 = inlined_call_operand.vmem [shape: f32[32,1], index: 17, kind: input, shape index: {}]
  %s18 = inlined_call_operand.vmem [shape: f32[32,1], index: 18, kind: input, shape index: {}]
  %s19 = inlined_call_operand.<no memory space> [shape: f32[1,1], index: 19, kind: input, shape index: {}]
  %s20 = inlined_call_operand.vmem [shape: f32[1,128], index: 20, kind: output, shape index: {}]
  %s21 = sld [smem:[#allocation0]]
  $region90: #{transformer_predictor.1} parent=0
    _
  %s23 = ssub.s32 1, %s21
  %s24 = scalar_select 0, %s23, %s21
  %v25 = vstv %s19
  %26 = vst [vmem:[#allocation2] sm:$0x1] %v25
  // Predicated region
  $region2: #{transformer_predictor.1} parent=0 // pred_check
    _
  $region3: #{transformer_predictor.1} parent=0 // pred_check_branch
    %28 = sbr.rel (0) target = $region5
  $region4: #{transformer_predictor.1} parent=0 // pred_region
    _
  $region5: #{transformer_predictor.1} parent=0 // pred_fallthru
    _
  // Predicated region
  $region6: #{transformer_predictor.1} parent=0 // pred_check
    _
  $region7: #{transformer_predictor.1} parent=0 // pred_check_branch
    %30 = sbr.rel (0) target = $region9
  $region8: #{transformer_predictor.1} parent=0 // pred_region
    _
  $region9: #{transformer_predictor.1} parent=0 // pred_fallthru
    _
  // Predicated region
  $region10: #{transformer_predictor.1} parent=0 // pred_check
    _
  $region11: #{transformer_predictor.1} parent=0 // pred_check_branch
    %32 = sbr.rel (0) target = $region13
  $region12: #{transformer_predictor.1} parent=0 // pred_region
    _
  $region13: #{transformer_predictor.1} parent=0 // pred_fallthru
    _
  // Predicated region
  $region14: #{transformer_predictor.1} parent=0 // pred_check
    _
  $region15: #{transformer_predictor.1} parent=0 // pred_check_branch
    %34 = sbr.rel (0) target = $region17
  $region16: #{transformer_predictor.1} parent=0 // pred_region
    _
  $region17: #{transformer_predictor.1} parent=0 // pred_fallthru
    _
  // Predicated region
  $region18: #{transformer_predictor.1} parent=0 // pred_check
    _
  $region19: #{transformer_predictor.1} parent=0 // pred_check_branch
    %36 = sbr.rel (0) target = $region21
  $region20: #{transformer_predictor.1} parent=0 // pred_region
    _
  $region21: #{transformer_predictor.1} parent=0 // pred_fallthru
    _
  // Predicated region
  $region22: #{transformer_predictor.1} parent=0 // pred_check
    _
  $region23: #{transformer_predictor.1} parent=0 // pred_check_branch
    %38 = sbr.rel (0) target = $region25
  $region24: #{transformer_predictor.1} parent=0 // pred_region
    _
  $region25: #{transformer_predictor.1} parent=0 // pred_fallthru
    _
  // Predicated region
  $region26: #{transformer_predictor.1} parent=0 // pred_check
    _
  $region27: #{transformer_predictor.1} parent=0 // pred_check_branch
    %40 = sbr.rel (0) target = $region29
  $region28: #{transformer_predictor.1} parent=0 // pred_region
    _
  $region29: #{transformer_predictor.1} parent=0 // pred_fallthru
    _
  // Predicated region
  $region30: #{transformer_predictor.1} parent=0 // pred_check
    _
  $region31: #{transformer_predictor.1} parent=0 // pred_check_branch
    %42 = sbr.rel (0) target = $region33
  $region32: #{transformer_predictor.1} parent=0 // pred_region
    _
  $region33: #{transformer_predictor.1} parent=0 // pred_fallthru
    _
  // Predicated region
  $region34: #{transformer_predictor.1} parent=0 // pred_check
    _
  $region35: #{transformer_predictor.1} parent=0 // pred_check_branch
    %44 = sbr.rel (0) target = $region37
  $region36: #{transformer_predictor.1} parent=0 // pred_region
    _
  $region37: #{transformer_predictor.1} parent=0 // pred_fallthru
    _
  // Predicated region
  $region38: #{transformer_predictor.1} parent=0 // pred_check
    _
  $region39: #{transformer_predictor.1} parent=0 // pred_check_branch
    %46 = sbr.rel (0) target = $region41
  $region40: #{transformer_predictor.1} parent=0 // pred_region
    _
  $region41: #{transformer_predictor.1} parent=0 // pred_fallthru
    _
  // Predicated region
  $region42: #{transformer_predictor.1} parent=0 // pred_check
    _
  $region43: #{transformer_predictor.1} parent=0 // pred_check_branch
    %48 = sbr.rel (0) target = $region45
  $region44: #{transformer_predictor.1} parent=0 // pred_region
    _
  $region45: #{transformer_predictor.1} parent=0 // pred_fallthru
    _
  // Predicated region
  $region46: #{transformer_predictor.1} parent=0 // pred_check
    _
  $region47: #{transformer_predictor.1} parent=0 // pred_check_branch
    %50 = sbr.rel (0) target = $region49
  $region48: #{transformer_predictor.1} parent=0 // pred_region
    _
  $region49: #{transformer_predictor.1} parent=0 // pred_fallthru
    _
  // Predicated region
  $region50: #{transformer_predictor.1} parent=0 // pred_check
    _
  $region51: #{transformer_predictor.1} parent=0 // pred_check_branch
    %52 = sbr.rel (0) target = $region53
  $region52: #{transformer_predictor.1} parent=0 // pred_region
    _
  $region53: #{transformer_predictor.1} parent=0 // pred_fallthru
    _
  // Predicated region
  $region54: #{transformer_predictor.1} parent=0 // pred_check
    _
  $region55: #{transformer_predictor.1} parent=0 // pred_check_branch
    %54 = sbr.rel (0) target = $region57
  $region56: #{transformer_predictor.1} parent=0 // pred_region
    _
  $region57: #{transformer_predictor.1} parent=0 // pred_fallthru
    _
  // Predicated region
  $region58: #{transformer_predictor.1} parent=0 // pred_check
    _
  $region59: #{transformer_predictor.1} parent=0 // pred_check_branch
    %56 = sbr.rel (0) target = $region61
  $region60: #{transformer_predictor.1} parent=0 // pred_region
    _
  $region61: #{transformer_predictor.1} parent=0 // pred_fallthru
    _
  // Predicated region
  $region62: #{transformer_predictor.1} parent=0 // pred_check
    _
  $region63: #{transformer_predictor.1} parent=0 // pred_check_branch
    %58 = sbr.rel (0) target = $region65
  $region64: #{transformer_predictor.1} parent=0 // pred_region
    _
  $region65: #{transformer_predictor.1} parent=0 // pred_fallthru
    _
  // Predicated region
  $region66: #{transformer_predictor.1} parent=0 // pred_check
    _
  $region67: #{transformer_predictor.1} parent=0 // pred_check_branch
    %60 = sbr.rel (0) target = $region69
  $region68: #{transformer_predictor.1} parent=0 // pred_region
    _
  $region69: #{transformer_predictor.1} parent=0 // pred_fallthru
    _
  // Predicated region
  $region70: #{transformer_predictor.1} parent=0 // pred_check
    _
  $region71: #{transformer_predictor.1} parent=0 // pred_check_branch
    %62 = sbr.rel (0) target = $region73
  $region72: #{transformer_predictor.1} parent=0 // pred_region
    _
  $region73: #{transformer_predictor.1} parent=0 // pred_fallthru
    _
  // Predicated region
  $region74: #{transformer_predictor.1} parent=0 // pred_check
    _
  $region75: #{transformer_predictor.1} parent=0 // pred_check_branch
    %64 = sbr.rel (0) target = $region77
  $region76: #{transformer_predictor.1} parent=0 // pred_region
    _
  $region77: #{transformer_predictor.1} parent=0 // pred_fallthru
    _
  // Predicated region
  $region78: #{transformer_predictor.1} parent=0 // pred_check
    _
  $region79: #{transformer_predictor.1} parent=0 // pred_check_branch
    %66 = sbr.rel (0) target = $region81
  $region80: #{transformer_predictor.1} parent=0 // pred_region
    _
  $region81: #{transformer_predictor.1} parent=0 // pred_fallthru
    _
  %v67 = vld [vmem:[%s0] sm:$0xff]
  %v68 = vld [vmem:[%s0 + $0x8] sm:$0xff]
  %v69 = vld [vmem:[%s1] sm:$0xff]
  %v70 = vld [vmem:[%s1 + $0x8] sm:$0xff]
  %v71 = vld [vmem:[%s1 + $0x10] sm:$0xff]
  %v72 = vld [vmem:[%s1 + $0x18] sm:$0xff]
  %v73 = vld [vmem:[%s2] sm:$0xff]
  %v74 = vld [vmem:[%s2 + $0x8] sm:$0xff]
  %v75 = vld [vmem:[%s2 + $0x10] sm:$0xff]
  %v76 = vld [vmem:[%s2 + $0x18] sm:$0xff]
  %78 = vset.pattern.permute.xlu0 0
  %79 = vperm.xlu0 %78, %v73
  %v80 = vpop.permute.xlu0 %79
  %83 = vset.pattern.permute.xlu0 0
  %84 = vperm.xlu0 %83, %v74
  %v85 = vpop.permute.xlu0 %84
  %88 = vset.pattern.permute.xlu0 0
  %89 = vperm.xlu0 %88, %v75
  %v90 = vpop.permute.xlu0 %89
  %93 = vset.pattern.permute.xlu0 0
  %94 = vperm.xlu0 %93, %v76
  %v95 = vpop.permute.xlu0 %94
  %vm97 = vcmask 130048
  %v99 = vsel %vm97, %v69, 0
  %v102 = vsel %vm97, %v70, 0
  %v105 = vsel %vm97, %v71, 0
  %v108 = vsel %vm97, %v72, 0
  %110 = vmatprep.subr.mxu0 0.0
  %111 = vmatpush1.msra.mxu0 %v67
  %112 = vmatprep.subr.mxu0 0.0
  %113 = vmatpush1.msra.mxu0 %v68
  %114 = vmatprep.subr.mxu0 0.0
  %115 = vmatpush1.msra.mxu0 0.0
  %116 = vmatprep.subr.mxu0 0.0
  %117 = vmatpush1.msra.mxu0 0.0
  %118 = vmatprep.subr.mxu0 0.0
  %119 = vmatpush1.msra.mxu0 0.0
  %120 = vmatprep.subr.mxu0 0.0
  %121 = vmatpush1.msra.mxu0 0.0
  %122 = vmatprep.subr.mxu0 0.0
  %123 = vmatpush1.msra.mxu0 0.0
  %124 = vmatprep.subr.mxu0 0.0
  %125 = vmatpush1.msra.mxu0 0.0
  %126 = vmatprep.subr.mxu0 0.0
  %127 = vmatpush1.msra.mxu0 0.0
  %128 = vmatprep.subr.mxu0 0.0
  %129 = vmatpush1.msra.mxu0 0.0
  %130 = vmatprep.subr.mxu0 0.0
  %131 = vmatpush1.msra.mxu0 0.0
  %132 = vmatprep.subr.mxu0 0.0
  %133 = vmatpush1.msra.mxu0 0.0
  %134 = vmatprep.subr.mxu0 0.0
  %135 = vmatpush1.msra.mxu0 0.0
  %136 = vmatprep.subr.mxu0 0.0
  %137 = vmatpush1.msra.mxu0 0.0
  %138 = vmatprep.subr.mxu0 0.0
  %139 = vmatpush1.msra.mxu0 0.0
  %140 = vmatprep.subr.mxu0 0.0
  %141 = vmatpush1.msra.mxu0 0.0
  %142 = vmatprep.subr.mxu0 0.0
  %143 = vmatpush1.msra.mxu0 0.0
  %144 = vmatprep.subr.mxu0 0.0
  %145 = vmatpush1.msra.mxu0 0.0
  %146 = vmatprep.subr.mxu0 0.0
  %147 = vmatpush1.msra.mxu0 0.0
  %148 = vmatprep.subr.mxu0 0.0
  %149 = vmatpush1.msra.mxu0 0.0
  %150 = vmatprep.subr.mxu0 0.0
  %151 = vmatpush1.msra.mxu0 0.0
  %152 = vmatprep.subr.mxu0 0.0
  %153 = vmatpush1.msra.mxu0 0.0
  %154 = vmatprep.subr.mxu0 0.0
  %155 = vmatpush1.msra.mxu0 0.0
  %156 = vmatprep.subr.mxu0 0.0
  %157 = vmatpush1.msra.mxu0 0.0
  %158 = vmatprep.subr.mxu0 0.0
  %159 = vmatpush1.msra.mxu0 0.0
  %160 = vmatprep.subr.mxu0 0.0
  %161 = vmatpush1.msra.mxu0 0.0
  %162 = vmatprep.subr.mxu0 0.0
  %163 = vmatpush1.msra.mxu0 0.0
  %164 = vmatprep.subr.mxu0 0.0
  %165 = vmatpush1.msra.mxu0 0.0
  %166 = vmatprep.subr.mxu0 0.0
  %167 = vmatpush1.msra.mxu0 0.0
  %168 = vmatprep.subr.mxu0 0.0
  %169 = vmatpush1.msra.mxu0 0.0
  %170 = vmatprep.subr.mxu0 0.0
  %171 = vmatpush1.msra.mxu0 0.0
  %172 = vmatprep.subr.mxu0 0.0
  %173 = vmatpush1.msra.mxu0 0.0
  %174 = vmatprep.mubr.f32.mxu0 0.0
  %175 = vmatmul.mubr.f32.gmra.mrb[0].mxu0 %v99
  %v176 = vpop.f32.mrb[0].mxu0
  %v177 = vadd.f32 %v80, %v176
  %v178 = vpop.f32.mrb[0].mxu0
  %179 = vmatprep.mubr.f32.mxu0 0.0
  %180 = vmatmul.mubr.f32.gmra.mrb[0].mxu0 %v102
  %v181 = vpop.f32.mrb[0].mxu0
  %v182 = vadd.f32 %v85, %v181
  %v183 = vpop.f32.mrb[0].mxu0
  %184 = vmatprep.mubr.f32.mxu0 0.0
  %185 = vmatmul.mubr.f32.gmra.mrb[0].mxu0 %v105
  %v186 = vpop.f32.mrb[0].mxu0
  %v187 = vadd.f32 %v90, %v186
  %v188 = vpop.f32.mrb[0].mxu0
  %189 = vmatprep.mubr.f32.mxu0 0.0
  %190 = vmatmul.mubr.f32.gmra.mrb[0].mxu0 %v108
  %v191 = vpop.f32.mrb[0].mxu0
  %v192 = vadd.f32 %v95, %v191
  %v193 = vpop.f32.mrb[0].mxu0
  %194 = vdwg.mxu0
  %v195 = vadd.f32 %v177, %v182
  %v196 = vadd.f32 %v195, %v187
  %v197 = vadd.f32 %v196, %v192
  %v198 = vrot.slane %v197, 4
  %v199 = vadd.f32 %v197, %v198
  %v200 = vrot.slane %v199, 2
  %v201 = vadd.f32 %v199, %v200
  %v202 = vrot.slane %v201, 1
  %v203 = vadd.f32 %v201, %v202
  %v204 = vrcp.pop 32.0
  %v205 = vmul.f32 %v203, %v204
  %v206 = vmul.f32 %v177, %v177
  %v207 = vmul.f32 %v182, %v182
  %v208 = vmul.f32 %v187, %v187
  %v209 = vmul.f32 %v192, %v192
  %v210 = vadd.f32 %v206, %v207
  %v211 = vadd.f32 %v210, %v208
  %v212 = vadd.f32 %v211, %v209
  %v213 = vrot.slane %v212, 4
  %v214 = vadd.f32 %v212, %v213
  %v215 = vrot.slane %v214, 2
  %v216 = vadd.f32 %v214, %v215
  %v217 = vrot.slane %v216, 1
  %v218 = vadd.f32 %v216, %v217
  %v219 = vmul.f32 %v218, %v204
  %v220 = vmul.f32 %v205, %v205
  %v221 = vsub.f32 %v219, %v220
  %v222 = vmax.f32 %v221, 0.0
  %v223 = vsub.f32 %v177, %v205
  %v224 = vsub.f32 %v182, %v205
  %v225 = vsub.f32 %v187, %v205
  %v226 = vsub.f32 %v192, %v205
  %v227 = vadd.f32 %v222, 1e-05
  %v228 = vrsqrt.pop %v227
  %v229 = vmul.f32 %v223, %v228
  %v230 = vmul.f32 %v224, %v228
  %v231 = vmul.f32 %v225, %v228
  %v232 = vmul.f32 %v226, %v228
  %v233 = vld [vmem:[%s3] sm:$0xff]
  %v234 = vld [vmem:[%s3 + $0x8] sm:$0xff]
  %v235 = vld [vmem:[%s3 + $0x10] sm:$0xff]
  %v236 = vld [vmem:[%s3 + $0x18] sm:$0xff]
  %238 = vset.pattern.permute.xlu0 0
  %239 = vperm.xlu0 %238, %v233
  %v240 = vpop.permute.xlu0 %239
  %243 = vset.pattern.permute.xlu0 0
  %244 = vperm.xlu0 %243, %v234
  %v245 = vpop.permute.xlu0 %244
  %248 = vset.pattern.permute.xlu0 0
  %249 = vperm.xlu0 %248, %v235
  %v250 = vpop.permute.xlu0 %249
  %253 = vset.pattern.permute.xlu0 0
  %254 = vperm.xlu0 %253, %v236
  %v255 = vpop.permute.xlu0 %254
  %v257 = vmul.f32 %v229, %v240
  %v258 = vmul.f32 %v230, %v245
  %v259 = vmul.f32 %v231, %v250
  %v260 = vmul.f32 %v232, %v255
  %v261 = vld [vmem:[%s4] sm:$0xff]
  %v262 = vld [vmem:[%s4 + $0x8] sm:$0xff]
  %v263 = vld [vmem:[%s4 + $0x10] sm:$0xff]
  %v264 = vld [vmem:[%s4 + $0x18] sm:$0xff]
  %266 = vset.pattern.permute.xlu0 0
  %267 = vperm.xlu0 %266, %v261
  %v268 = vpop.permute.xlu0 %267
  %271 = vset.pattern.permute.xlu0 0
  %272 = vperm.xlu0 %271, %v262
  %v273 = vpop.permute.xlu0 %272
  %276 = vset.pattern.permute.xlu0 0
  %277 = vperm.xlu0 %276, %v263
  %v278 = vpop.permute.xlu0 %277
  %281 = vset.pattern.permute.xlu0 0
  %282 = vperm.xlu0 %281, %v264
  %v283 = vpop.permute.xlu0 %282
  %v285 = vadd.f32 %v257, %v268
  %v286 = vadd.f32 %v258, %v273
  %v287 = vadd.f32 %v259, %v278
  %v288 = vadd.f32 %v260, %v283
  %v289 = vmax.f32 %v285, 0.0
  %v290 = vmax.f32 %v286, 0.0
  %v291 = vmax.f32 %v287, 0.0
  %v292 = vmax.f32 %v288, 0.0
  %v293 = vld [vmem:[%s7] sm:$0xff]
  %v294 = vld [vmem:[%s7 + $0x8] sm:$0xff]
  %v295 = vld [vmem:[%s8] sm:$0xff]
  %v296 = vld [vmem:[%s8 + $0x8] sm:$0xff]
  %298 = vset.pattern.permute.xlu0 0
  %299 = vperm.xlu0 %298, %v295
  %v300 = vpop.permute.xlu0 %299
  %303 = vset.pattern.permute.xlu0 0
  %304 = vperm.xlu0 %303, %v296
  %v305 = vpop.permute.xlu0 %304
  %vm307 = vcmask 261120
  %v309 = vsel %vm307, %v293, 0
  %v312 = vsel %vm307, %v294, 0
  %314 = vmatprep.subr.mxu0 0.0
  %315 = vmatpush1.msra.mxu0 %v289
  %316 = vmatprep.subr.mxu0 0.0
  %317 = vmatpush1.msra.mxu0 %v290
  %318 = vmatprep.subr.mxu0 0.0
  %319 = vmatpush1.msra.mxu0 %v291
  %320 = vmatprep.subr.mxu0 0.0
  %321 = vmatpush1.msra.mxu0 %v292
  %322 = vmatprep.subr.mxu0 0.0
  %323 = vmatpush1.msra.mxu0 0.0
  %324 = vmatprep.subr.mxu0 0.0
  %325 = vmatpush1.msra.mxu0 0.0
  %326 = vmatprep.subr.mxu0 0.0
  %327 = vmatpush1.msra.mxu0 0.0
  %328 = vmatprep.subr.mxu0 0.0
  %329 = vmatpush1.msra.mxu0 0.0
  %330 = vmatprep.subr.mxu0 0.0
  %331 = vmatpush1.msra.mxu0 0.0
  %332 = vmatprep.subr.mxu0 0.0
  %333 = vmatpush1.msra.mxu0 0.0
  %334 = vmatprep.subr.mxu0 0.0
  %335 = vmatpush1.msra.mxu0 0.0
  %336 = vmatprep.subr.mxu0 0.0
  %337 = vmatpush1.msra.mxu0 0.0
  %338 = vmatprep.subr.mxu0 0.0
  %339 = vmatpush1.msra.mxu0 0.0
  %340 = vmatprep.subr.mxu0 0.0
  %341 = vmatpush1.msra.mxu0 0.0
  %342 = vmatprep.subr.mxu0 0.0
  %343 = vmatpush1.msra.mxu0 0.0
  %344 = vmatprep.subr.mxu0 0.0
  %345 = vmatpush1.msra.mxu0 0.0
  %346 = vmatprep.subr.mxu0 0.0
  %347 = vmatpush1.msra.mxu0 0.0
  %348 = vmatprep.subr.mxu0 0.0
  %349 = vmatpush1.msra.mxu0 0.0
  %350 = vmatprep.subr.mxu0 0.0
  %351 = vmatpush1.msra.mxu0 0.0
  %352 = vmatprep.subr.mxu0 0.0
  %353 = vmatpush1.msra.mxu0 0.0
  %354 = vmatprep.subr.mxu0 0.0
  %355 = vmatpush1.msra.mxu0 0.0
  %356 = vmatprep.subr.mxu0 0.0
  %357 = vmatpush1.msra.mxu0 0.0
  %358 = vmatprep.subr.mxu0 0.0
  %359 = vmatpush1.msra.mxu0 0.0
  %360 = vmatprep.subr.mxu0 0.0
  %361 = vmatpush1.msra.mxu0 0.0
  %362 = vmatprep.subr.mxu0 0.0
  %363 = vmatpush1.msra.mxu0 0.0
  %364 = vmatprep.subr.mxu0 0.0
  %365 = vmatpush1.msra.mxu0 0.0
  %366 = vmatprep.subr.mxu0 0.0
  %367 = vmatpush1.msra.mxu0 0.0
  %368 = vmatprep.subr.mxu0 0.0
  %369 = vmatpush1.msra.mxu0 0.0
  %370 = vmatprep.subr.mxu0 0.0
  %371 = vmatpush1.msra.mxu0 0.0
  %372 = vmatprep.subr.mxu0 0.0
  %373 = vmatpush1.msra.mxu0 0.0
  %374 = vmatprep.subr.mxu0 0.0
  %375 = vmatpush1.msra.mxu0 0.0
  %376 = vmatprep.subr.mxu0 0.0
  %377 = vmatpush1.msra.mxu0 0.0
  %378 = vmatprep.mubr.f32.mxu0 0.0
  %379 = vmatmul.mubr.f32.gmra.mrb[0].mxu0 %v309
  %v380 = vpop.f32.mrb[0].mxu0
  %v381 = vadd.f32 %v300, %v380
  %v382 = vpop.f32.mrb[0].mxu0
  %383 = vmatprep.mubr.f32.mxu0 0.0
  %384 = vmatmul.mubr.f32.gmra.mrb[0].mxu0 %v312
  %v385 = vpop.f32.mrb[0].mxu0
  %v386 = vadd.f32 %v305, %v385
  %v387 = vpop.f32.mrb[0].mxu0
  %388 = vdwg.mxu0
  %v389 = vmax.f32 %v381, 0.0
  %v390 = vmax.f32 %v386, 0.0
  %v391 = vld [vmem:[%s9] sm:$0xff]
  %v392 = vld [vmem:[%s9 + $0x8] sm:$0xff]
  %v393 = vld [vmem:[%s10] sm:$0xff]
  %v394 = vld [vmem:[%s10 + $0x8] sm:$0xff]
  %396 = vset.pattern.permute.xlu0 0
  %397 = vperm.xlu0 %396, %v393
  %v398 = vpop.permute.xlu0 %397
  %401 = vset.pattern.permute.xlu0 0
  %402 = vperm.xlu0 %401, %v394
  %v403 = vpop.permute.xlu0 %402
  %v406 = vsel %vm97, %v391, 0
  %v409 = vsel %vm97, %v392, 0
  %411 = vmatprep.subr.mxu0 0.0
  %412 = vmatpush1.msra.mxu0 %v389
  %413 = vmatprep.subr.mxu0 0.0
  %414 = vmatpush1.msra.mxu0 %v390
  %415 = vmatprep.subr.mxu0 0.0
  %416 = vmatpush1.msra.mxu0 0.0
  %417 = vmatprep.subr.mxu0 0.0
  %418 = vmatpush1.msra.mxu0 0.0
  %419 = vmatprep.subr.mxu0 0.0
  %420 = vmatpush1.msra.mxu0 0.0
  %421 = vmatprep.subr.mxu0 0.0
  %422 = vmatpush1.msra.mxu0 0.0
  %423 = vmatprep.subr.mxu0 0.0
  %424 = vmatpush1.msra.mxu0 0.0
  %425 = vmatprep.subr.mxu0 0.0
  %426 = vmatpush1.msra.mxu0 0.0
  %427 = vmatprep.subr.mxu0 0.0
  %428 = vmatpush1.msra.mxu0 0.0
  %429 = vmatprep.subr.mxu0 0.0
  %430 = vmatpush1.msra.mxu0 0.0
  %431 = vmatprep.subr.mxu0 0.0
  %432 = vmatpush1.msra.mxu0 0.0
  %433 = vmatprep.subr.mxu0 0.0
  %434 = vmatpush1.msra.mxu0 0.0
  %435 = vmatprep.subr.mxu0 0.0
  %436 = vmatpush1.msra.mxu0 0.0
  %437 = vmatprep.subr.mxu0 0.0
  %438 = vmatpush1.msra.mxu0 0.0
  %439 = vmatprep.subr.mxu0 0.0
  %440 = vmatpush1.msra.mxu0 0.0
  %441 = vmatprep.subr.mxu0 0.0
  %442 = vmatpush1.msra.mxu0 0.0
  %443 = vmatprep.subr.mxu0 0.0
  %444 = vmatpush1.msra.mxu0 0.0
  %445 = vmatprep.subr.mxu0 0.0
  %446 = vmatpush1.msra.mxu0 0.0
  %447 = vmatprep.subr.mxu0 0.0
  %448 = vmatpush1.msra.mxu0 0.0
  %449 = vmatprep.subr.mxu0 0.0
  %450 = vmatpush1.msra.mxu0 0.0
  %451 = vmatprep.subr.mxu0 0.0
  %452 = vmatpush1.msra.mxu0 0.0
  %453 = vmatprep.subr.mxu0 0.0
  %454 = vmatpush1.msra.mxu0 0.0
  %455 = vmatprep.subr.mxu0 0.0
  %456 = vmatpush1.msra.mxu0 0.0
  %457 = vmatprep.subr.mxu0 0.0
  %458 = vmatpush1.msra.mxu0 0.0
  %459 = vmatprep.subr.mxu0 0.0
  %460 = vmatpush1.msra.mxu0 0.0
  %461 = vmatprep.subr.mxu0 0.0
  %462 = vmatpush1.msra.mxu0 0.0
  %463 = vmatprep.subr.mxu0 0.0
  %464 = vmatpush1.msra.mxu0 0.0
  %465 = vmatprep.subr.mxu0 0.0
  %466 = vmatpush1.msra.mxu0 0.0
  %467 = vmatprep.subr.mxu0 0.0
  %468 = vmatpush1.msra.mxu0 0.0
  %469 = vmatprep.subr.mxu0 0.0
  %470 = vmatpush1.msra.mxu0 0.0
  %471 = vmatprep.subr.mxu0 0.0
  %472 = vmatpush1.msra.mxu0 0.0
  %473 = vmatprep.subr.mxu0 0.0
  %474 = vmatpush1.msra.mxu0 0.0
  %475 = vmatprep.mubr.f32.mxu0 0.0
  %476 = vmatmul.mubr.f32.gmra.mrb[0].mxu0 %v406
  %v477 = vpop.f32.mrb[0].mxu0
  %v478 = vadd.f32 %v398, %v477
  %v479 = vpop.f32.mrb[0].mxu0
  %480 = vmatprep.mubr.f32.mxu0 0.0
  %481 = vmatmul.mubr.f32.gmra.mrb[0].mxu0 %v409
  %v482 = vpop.f32.mrb[0].mxu0
  %v483 = vadd.f32 %v403, %v482
  %v484 = vpop.f32.mrb[0].mxu0
  %485 = vdwg.mxu0
  %v486 = vld [vmem:[%s5] sm:$0xff]
  %v487 = vld [vmem:[%s5 + $0x8] sm:$0xff]
  %v488 = vld [vmem:[%s5 + $0x10] sm:$0xff]
  %v489 = vld [vmem:[%s5 + $0x18] sm:$0xff]
  %v490 = vld [vmem:[%s6] sm:$0xff]
  %v491 = vld [vmem:[%s6 + $0x8] sm:$0xff]
  %v492 = vld [vmem:[%s6 + $0x10] sm:$0xff]
  %v493 = vld [vmem:[%s6 + $0x18] sm:$0xff]
  %495 = vset.pattern.permute.xlu0 0
  %496 = vperm.xlu0 %495, %v490
  %v497 = vpop.permute.xlu0 %496
  %500 = vset.pattern.permute.xlu0 0
  %501 = vperm.xlu0 %500, %v491
  %v502 = vpop.permute.xlu0 %501
  %505 = vset.pattern.permute.xlu0 0
  %506 = vperm.xlu0 %505, %v492
  %v507 = vpop.permute.xlu0 %506
  %510 = vset.pattern.permute.xlu0 0
  %511 = vperm.xlu0 %510, %v493
  %v512 = vpop.permute.xlu0 %511
  %v515 = vsel %vm307, %v486, 0
  %v518 = vsel %vm307, %v487, 0
  %v521 = vsel %vm307, %v488, 0
  %v524 = vsel %vm307, %v489, 0
  %526 = vmatprep.subr.mxu0 0.0
  %527 = vmatpush1.msra.mxu0 %v289
  %528 = vmatprep.subr.mxu0 0.0
  %529 = vmatpush1.msra.mxu0 %v290
  %530 = vmatprep.subr.mxu0 0.0
  %531 = vmatpush1.msra.mxu0 %v291
  %532 = vmatprep.subr.mxu0 0.0
  %533 = vmatpush1.msra.mxu0 %v292
  %534 = vmatprep.subr.mxu0 0.0
  %535 = vmatpush1.msra.mxu0 0.0
  %536 = vmatprep.subr.mxu0 0.0
  %537 = vmatpush1.msra.mxu0 0.0
  %538 = vmatprep.subr.mxu0 0.0
  %539 = vmatpush1.msra.mxu0 0.0
  %540 = vmatprep.subr.mxu0 0.0
  %541 = vmatpush1.msra.mxu0 0.0
  %542 = vmatprep.subr.mxu0 0.0
  %543 = vmatpush1.msra.mxu0 0.0
  %544 = vmatprep.subr.mxu0 0.0
  %545 = vmatpush1.msra.mxu0 0.0
  %546 = vmatprep.subr.mxu0 0.0
  %547 = vmatpush1.msra.mxu0 0.0
  %548 = vmatprep.subr.mxu0 0.0
  %549 = vmatpush1.msra.mxu0 0.0
  %550 = vmatprep.subr.mxu0 0.0
  %551 = vmatpush1.msra.mxu0 0.0
  %552 = vmatprep.subr.mxu0 0.0
  %553 = vmatpush1.msra.mxu0 0.0
  %554 = vmatprep.subr.mxu0 0.0
  %555 = vmatpush1.msra.mxu0 0.0
  %556 = vmatprep.subr.mxu0 0.0
  %557 = vmatpush1.msra.mxu0 0.0
  %558 = vmatprep.subr.mxu0 0.0
  %559 = vmatpush1.msra.mxu0 0.0
  %560 = vmatprep.subr.mxu0 0.0
  %561 = vmatpush1.msra.mxu0 0.0
  %562 = vmatprep.subr.mxu0 0.0
  %563 = vmatpush1.msra.mxu0 0.0
  %564 = vmatprep.subr.mxu0 0.0
  %565 = vmatpush1.msra.mxu0 0.0
  %566 = vmatprep.subr.mxu0 0.0
  %567 = vmatpush1.msra.mxu0 0.0
  %568 = vmatprep.subr.mxu0 0.0
  %569 = vmatpush1.msra.mxu0 0.0
  %570 = vmatprep.subr.mxu0 0.0
  %571 = vmatpush1.msra.mxu0 0.0
  %572 = vmatprep.subr.mxu0 0.0
  %573 = vmatpush1.msra.mxu0 0.0
  %574 = vmatprep.subr.mxu0 0.0
  %575 = vmatpush1.msra.mxu0 0.0
  %576 = vmatprep.subr.mxu0 0.0
  %577 = vmatpush1.msra.mxu0 0.0
  %578 = vmatprep.subr.mxu0 0.0
  %579 = vmatpush1.msra.mxu0 0.0
  %580 = vmatprep.subr.mxu0 0.0
  %581 = vmatpush1.msra.mxu0 0.0
  %582 = vmatprep.subr.mxu0 0.0
  %583 = vmatpush1.msra.mxu0 0.0
  %584 = vmatprep.subr.mxu0 0.0
  %585 = vmatpush1.msra.mxu0 0.0
  %586 = vmatprep.subr.mxu0 0.0
  %587 = vmatpush1.msra.mxu0 0.0
  %588 = vmatprep.subr.mxu0 0.0
  %589 = vmatpush1.msra.mxu0 0.0
  %590 = vmatprep.mubr.f32.mxu0 0.0
  %591 = vmatmul.mubr.f32.gmra.mrb[0].mxu0 %v515
  %v592 = vpop.f32.mrb[0].mxu0
  %v593 = vadd.f32 %v497, %v592
  %v594 = vpop.f32.mrb[0].mxu0
  %595 = vmatprep.mubr.f32.mxu0 0.0
  %596 = vmatmul.mubr.f32.gmra.mrb[0].mxu0 %v518
  %v597 = vpop.f32.mrb[0].mxu0
  %v598 = vadd.f32 %v502, %v597
  %v599 = vpop.f32.mrb[0].mxu0
  %600 = vmatprep.mubr.f32.mxu0 0.0
  %601 = vmatmul.mubr.f32.gmra.mrb[0].mxu0 %v521
  %v602 = vpop.f32.mrb[0].mxu0
  %v603 = vadd.f32 %v507, %v602
  %v604 = vpop.f32.mrb[0].mxu0
  %605 = vmatprep.mubr.f32.mxu0 0.0
  %606 = vmatmul.mubr.f32.gmra.mrb[0].mxu0 %v524
  %v607 = vpop.f32.mrb[0].mxu0
  %v608 = vadd.f32 %v512, %v607
  %v609 = vpop.f32.mrb[0].mxu0
  %610 = vdwg.mxu0
  %v611 = vld [vmem:[%s11] sm:$0xff]
  %v612 = vld [vmem:[%s11 + $0x8] sm:$0xff]
  %v613 = vld [vmem:[%s11 + $0x10] sm:$0xff]
  %v614 = vld [vmem:[%s11 + $0x18] sm:$0xff]
  %v615 = vld [vmem:[%s11 + $0x20] sm:$0xff]
  %v616 = vld [vmem:[%s11 + $0x28] sm:$0xff]
  %v617 = vld [vmem:[%s11 + $0x30] sm:$0xff]
  %v618 = vld [vmem:[%s11 + $0x38] sm:$0xff]
  %v619 = vld [vmem:[%s12] sm:$0xff]
  %v620 = vld [vmem:[%s12 + $0x8] sm:$0xff]
  %v621 = vld [vmem:[%s12 + $0x10] sm:$0xff]
  %v622 = vld [vmem:[%s12 + $0x18] sm:$0xff]
  %v623 = vld [vmem:[%s12 + $0x20] sm:$0xff]
  %v624 = vld [vmem:[%s12 + $0x28] sm:$0xff]
  %v625 = vld [vmem:[%s12 + $0x30] sm:$0xff]
  %v626 = vld [vmem:[%s12 + $0x38] sm:$0xff]
  %628 = vset.pattern.permute.xlu0 0
  %629 = vperm.xlu0 %628, %v619
  %v630 = vpop.permute.xlu0 %629
  %633 = vset.pattern.permute.xlu0 0
  %634 = vperm.xlu0 %633, %v620
  %v635 = vpop.permute.xlu0 %634
  %638 = vset.pattern.permute.xlu0 0
  %639 = vperm.xlu0 %638, %v621
  %v640 = vpop.permute.xlu0 %639
  %643 = vset.pattern.permute.xlu0 0
  %644 = vperm.xlu0 %643, %v622
  %v645 = vpop.permute.xlu0 %644
  %648 = vset.pattern.permute.xlu0 0
  %649 = vperm.xlu0 %648, %v623
  %v650 = vpop.permute.xlu0 %649
  %653 = vset.pattern.permute.xlu0 0
  %654 = vperm.xlu0 %653, %v624
  %v655 = vpop.permute.xlu0 %654
  %658 = vset.pattern.permute.xlu0 0
  %659 = vperm.xlu0 %658, %v625
  %v660 = vpop.permute.xlu0 %659
  %663 = vset.pattern.permute.xlu0 0
  %664 = vperm.xlu0 %663, %v626
  %v665 = vpop.permute.xlu0 %664
  %v668 = vsel %vm307, %v611, 0
  %v671 = vsel %vm307, %v612, 0
  %v674 = vsel %vm307, %v613, 0
  %v677 = vsel %vm307, %v614, 0
  %v680 = vsel %vm307, %v615, 0
  %v683 = vsel %vm307, %v616, 0
  %v686 = vsel %vm307, %v617, 0
  %v689 = vsel %vm307, %v618, 0
  %691 = vmatprep.subr.mxu0 0.0
  %692 = vmatpush1.msra.mxu0 %v593
  %693 = vmatprep.subr.mxu0 0.0
  %694 = vmatpush1.msra.mxu0 %v598
  %695 = vmatprep.subr.mxu0 0.0
  %696 = vmatpush1.msra.mxu0 %v603
  %697 = vmatprep.subr.mxu0 0.0
  %698 = vmatpush1.msra.mxu0 %v608
  %699 = vmatprep.subr.mxu0 0.0
  %700 = vmatpush1.msra.mxu0 0.0
  %701 = vmatprep.subr.mxu0 0.0
  %702 = vmatpush1.msra.mxu0 0.0
  %703 = vmatprep.subr.mxu0 0.0
  %704 = vmatpush1.msra.mxu0 0.0
  %705 = vmatprep.subr.mxu0 0.0
  %706 = vmatpush1.msra.mxu0 0.0
  %707 = vmatprep.subr.mxu0 0.0
  %708 = vmatpush1.msra.mxu0 0.0
  %709 = vmatprep.subr.mxu0 0.0
  %710 = vmatpush1.msra.mxu0 0.0
  %711 = vmatprep.subr.mxu0 0.0
  %712 = vmatpush1.msra.mxu0 0.0
  %713 = vmatprep.subr.mxu0 0.0
  %714 = vmatpush1.msra.mxu0 0.0
  %715 = vmatprep.subr.mxu0 0.0
  %716 = vmatpush1.msra.mxu0 0.0
  %717 = vmatprep.subr.mxu0 0.0
  %718 = vmatpush1.msra.mxu0 0.0
  %719 = vmatprep.subr.mxu0 0.0
  %720 = vmatpush1.msra.mxu0 0.0
  %721 = vmatprep.subr.mxu0 0.0
  %722 = vmatpush1.msra.mxu0 0.0
  %723 = vmatprep.subr.mxu0 0.0
  %724 = vmatpush1.msra.mxu0 0.0
  %725 = vmatprep.subr.mxu0 0.0
  %726 = vmatpush1.msra.mxu0 0.0
  %727 = vmatprep.subr.mxu0 0.0
  %728 = vmatpush1.msra.mxu0 0.0
  %729 = vmatprep.subr.mxu0 0.0
  %730 = vmatpush1.msra.mxu0 0.0
  %731 = vmatprep.subr.mxu0 0.0
  %732 = vmatpush1.msra.mxu0 0.0
  %733 = vmatprep.subr.mxu0 0.0
  %734 = vmatpush1.msra.mxu0 0.0
  %735 = vmatprep.subr.mxu0 0.0
  %736 = vmatpush1.msra.mxu0 0.0
  %737 = vmatprep.subr.mxu0 0.0
  %738 = vmatpush1.msra.mxu0 0.0
  %739 = vmatprep.subr.mxu0 0.0
  %740 = vmatpush1.msra.mxu0 0.0
  %741 = vmatprep.subr.mxu0 0.0
  %742 = vmatpush1.msra.mxu0 0.0
  %743 = vmatprep.subr.mxu0 0.0
  %744 = vmatpush1.msra.mxu0 0.0
  %745 = vmatprep.subr.mxu0 0.0
  %746 = vmatpush1.msra.mxu0 0.0
  %747 = vmatprep.subr.mxu0 0.0
  %748 = vmatpush1.msra.mxu0 0.0
  %749 = vmatprep.subr.mxu0 0.0
  %750 = vmatpush1.msra.mxu0 0.0
  %751 = vmatprep.subr.mxu0 0.0
  %752 = vmatpush1.msra.mxu0 0.0
  %753 = vmatprep.subr.mxu0 0.0
  %754 = vmatpush1.msra.mxu0 0.0
  %755 = vmatprep.mubr.f32.mxu0 0.0
  %756 = vmatmul.mubr.f32.gmra.mrb[0].mxu0 %v668
  %v757 = vpop.f32.mrb[0].mxu0
  %v758 = vadd.f32 %v630, %v757
  %v759 = vpop.f32.mrb[0].mxu0
  %760 = vmatprep.mubr.f32.mxu0 0.0
  %761 = vmatmul.mubr.f32.gmra.mrb[0].mxu0 %v671
  %v762 = vpop.f32.mrb[0].mxu0
  %v763 = vadd.f32 %v635, %v762
  %v764 = vpop.f32.mrb[0].mxu0
  %765 = vmatprep.mubr.f32.mxu0 0.0
  %766 = vmatmul.mubr.f32.gmra.mrb[0].mxu0 %v674
  %v767 = vpop.f32.mrb[0].mxu0
  %v768 = vadd.f32 %v640, %v767
  %v769 = vpop.f32.mrb[0].mxu0
  %770 = vmatprep.mubr.f32.mxu0 0.0
  %771 = vmatmul.mubr.f32.gmra.mrb[0].mxu0 %v677
  %v772 = vpop.f32.mrb[0].mxu0
  %v773 = vadd.f32 %v645, %v772
  %v774 = vpop.f32.mrb[0].mxu0
  %775 = vmatprep.mubr.f32.mxu0 0.0
  %776 = vmatmul.mubr.f32.gmra.mrb[0].mxu0 %v680
  %v777 = vpop.f32.mrb[0].mxu0
  %v778 = vadd.f32 %v650, %v777
  %v779 = vpop.f32.mrb[0].mxu0
  %780 = vmatprep.mubr.f32.mxu0 0.0
  %781 = vmatmul.mubr.f32.gmra.mrb[0].mxu0 %v683
  %v782 = vpop.f32.mrb[0].mxu0
  %v783 = vadd.f32 %v655, %v782
  %v784 = vpop.f32.mrb[0].mxu0
  %785 = vmatprep.mubr.f32.mxu0 0.0
  %786 = vmatmul.mubr.f32.gmra.mrb[0].mxu0 %v686
  %v787 = vpop.f32.mrb[0].mxu0
  %v788 = vadd.f32 %v660, %v787
  %v789 = vpop.f32.mrb[0].mxu0
  %790 = vmatprep.mubr.f32.mxu0 0.0
  %791 = vmatmul.mubr.f32.gmra.mrb[0].mxu0 %v689
  %v792 = vpop.f32.mrb[0].mxu0
  %v793 = vadd.f32 %v665, %v792
  %v794 = vpop.f32.mrb[0].mxu0
  %795 = vdwg.mxu0
  %v796 = vmax.f32 %v758, 0.0
  %v797 = vmax.f32 %v763, 0.0
  %v798 = vmax.f32 %v768, 0.0
  %v799 = vmax.f32 %v773, 0.0
  %v800 = vmax.f32 %v778, 0.0
  %v801 = vmax.f32 %v783, 0.0
  %v802 = vmax.f32 %v788, 0.0
  %v803 = vmax.f32 %v793, 0.0
  %v804 = vld [vmem:[%s13] sm:$0xff]
  %v805 = vld [vmem:[%s13 + $0x8] sm:$0xff]
  %v806 = vld [vmem:[%s13 + $0x10] sm:$0xff]
  %v807 = vld [vmem:[%s13 + $0x18] sm:$0xff]
  %v808 = vld [vmem:[%s14] sm:$0xff]
  %v809 = vld [vmem:[%s14 + $0x8] sm:$0xff]
  %v810 = vld [vmem:[%s14 + $0x10] sm:$0xff]
  %v811 = vld [vmem:[%s14 + $0x18] sm:$0xff]
  %813 = vset.pattern.permute.xlu0 0
  %814 = vperm.xlu0 %813, %v808
  %v815 = vpop.permute.xlu0 %814
  %818 = vset.pattern.permute.xlu0 0
  %819 = vperm.xlu0 %818, %v809
  %v820 = vpop.permute.xlu0 %819
  %823 = vset.pattern.permute.xlu0 0
  %824 = vperm.xlu0 %823, %v810
  %v825 = vpop.permute.xlu0 %824
  %828 = vset.pattern.permute.xlu0 0
  %829 = vperm.xlu0 %828, %v811
  %v830 = vpop.permute.xlu0 %829
  %vm832 = vcmask 523264
  %v834 = vsel %vm832, %v804, 0
  %v837 = vsel %vm832, %v805, 0
  %v840 = vsel %vm832, %v806, 0
  %v843 = vsel %vm832, %v807, 0
  %845 = vmatprep.subr.mxu0 0.0
  %846 = vmatpush1.msra.mxu0 %v796
  %847 = vmatprep.subr.mxu0 0.0
  %848 = vmatpush1.msra.mxu0 %v797
  %849 = vmatprep.subr.mxu0 0.0
  %850 = vmatpush1.msra.mxu0 %v798
  %851 = vmatprep.subr.mxu0 0.0
  %852 = vmatpush1.msra.mxu0 %v799
  %853 = vmatprep.subr.mxu0 0.0
  %854 = vmatpush1.msra.mxu0 %v800
  %855 = vmatprep.subr.mxu0 0.0
  %856 = vmatpush1.msra.mxu0 %v801
  %857 = vmatprep.subr.mxu0 0.0
  %858 = vmatpush1.msra.mxu0 %v802
  %859 = vmatprep.subr.mxu0 0.0
  %860 = vmatpush1.msra.mxu0 %v803
  %861 = vmatprep.subr.mxu0 0.0
  %862 = vmatpush1.msra.mxu0 0.0
  %863 = vmatprep.subr.mxu0 0.0
  %864 = vmatpush1.msra.mxu0 0.0
  %865 = vmatprep.subr.mxu0 0.0
  %866 = vmatpush1.msra.mxu0 0.0
  %867 = vmatprep.subr.mxu0 0.0
  %868 = vmatpush1.msra.mxu0 0.0
  %869 = vmatprep.subr.mxu0 0.0
  %870 = vmatpush1.msra.mxu0 0.0
  %871 = vmatprep.subr.mxu0 0.0
  %872 = vmatpush1.msra.mxu0 0.0
  %873 = vmatprep.subr.mxu0 0.0
  %874 = vmatpush1.msra.mxu0 0.0
  %875 = vmatprep.subr.mxu0 0.0
  %876 = vmatpush1.msra.mxu0 0.0
  %877 = vmatprep.subr.mxu0 0.0
  %878 = vmatpush1.msra.mxu0 0.0
  %879 = vmatprep.subr.mxu0 0.0
  %880 = vmatpush1.msra.mxu0 0.0
  %881 = vmatprep.subr.mxu0 0.0
  %882 = vmatpush1.msra.mxu0 0.0
  %883 = vmatprep.subr.mxu0 0.0
  %884 = vmatpush1.msra.mxu0 0.0
  %885 = vmatprep.subr.mxu0 0.0
  %886 = vmatpush1.msra.mxu0 0.0
  %887 = vmatprep.subr.mxu0 0.0
  %888 = vmatpush1.msra.mxu0 0.0
  %889 = vmatprep.subr.mxu0 0.0
  %890 = vmatpush1.msra.mxu0 0.0
  %891 = vmatprep.subr.mxu0 0.0
  %892 = vmatpush1.msra.mxu0 0.0
  %893 = vmatprep.subr.mxu0 0.0
  %894 = vmatpush1.msra.mxu0 0.0
  %895 = vmatprep.subr.mxu0 0.0
  %896 = vmatpush1.msra.mxu0 0.0
  %897 = vmatprep.subr.mxu0 0.0
  %898 = vmatpush1.msra.mxu0 0.0
  %899 = vmatprep.subr.mxu0 0.0
  %900 = vmatpush1.msra.mxu0 0.0
  %901 = vmatprep.subr.mxu0 0.0
  %902 = vmatpush1.msra.mxu0 0.0
  %903 = vmatprep.subr.mxu0 0.0
  %904 = vmatpush1.msra.mxu0 0.0
  %905 = vmatprep.subr.mxu0 0.0
  %906 = vmatpush1.msra.mxu0 0.0
  %907 = vmatprep.subr.mxu0 0.0
  %908 = vmatpush1.msra.mxu0 0.0
  %909 = vmatprep.mubr.f32.mxu0 0.0
  %910 = vmatmul.mubr.f32.gmra.mrb[0].mxu0 %v834
  %v911 = vpop.f32.mrb[0].mxu0
  %v912 = vadd.f32 %v815, %v911
  %v913 = vpop.f32.mrb[0].mxu0
  %914 = vmatprep.mubr.f32.mxu0 0.0
  %915 = vmatmul.mubr.f32.gmra.mrb[0].mxu0 %v837
  %v916 = vpop.f32.mrb[0].mxu0
  %v917 = vadd.f32 %v820, %v916
  %v918 = vpop.f32.mrb[0].mxu0
  %919 = vmatprep.mubr.f32.mxu0 0.0
  %920 = vmatmul.mubr.f32.gmra.mrb[0].mxu0 %v840
  %v921 = vpop.f32.mrb[0].mxu0
  %v922 = vadd.f32 %v825, %v921
  %v923 = vpop.f32.mrb[0].mxu0
  %924 = vmatprep.mubr.f32.mxu0 0.0
  %925 = vmatmul.mubr.f32.gmra.mrb[0].mxu0 %v843
  %v926 = vpop.f32.mrb[0].mxu0
  %v927 = vadd.f32 %v830, %v926
  %v928 = vpop.f32.mrb[0].mxu0
  %929 = vdwg.mxu0
  %v930 = vadd.f32 %v912, %v917
  %v931 = vadd.f32 %v930, %v922
  %v932 = vadd.f32 %v931, %v927
  %v933 = vrot.slane %v932, 4
  %v934 = vadd.f32 %v932, %v933
  %v935 = vrot.slane %v934, 2
  %v936 = vadd.f32 %v934, %v935
  %v937 = vrot.slane %v936, 1
  %v938 = vadd.f32 %v936, %v937
  %v939 = vmul.f32 %v938, %v204
  %v940 = vmul.f32 %v912, %v912
  %v941 = vmul.f32 %v917, %v917
  %v942 = vmul.f32 %v922, %v922
  %v943 = vmul.f32 %v927, %v927
  %v944 = vadd.f32 %v940, %v941
  %v945 = vadd.f32 %v944, %v942
  %v946 = vadd.f32 %v945, %v943
  %v947 = vrot.slane %v946, 4
  %v948 = vadd.f32 %v946, %v947
  %v949 = vrot.slane %v948, 2
  %v950 = vadd.f32 %v948, %v949
  %v951 = vrot.slane %v950, 1
  %v952 = vadd.f32 %v950, %v951
  %v953 = vmul.f32 %v952, %v204
  %v954 = vmul.f32 %v939, %v939
  %v955 = vsub.f32 %v953, %v954
  %v956 = vmax.f32 %v955, 0.0
  %v957 = vsub.f32 %v912, %v939
  %v958 = vsub.f32 %v917, %v939
  %v959 = vsub.f32 %v922, %v939
  %v960 = vsub.f32 %v927, %v939
  %v961 = vadd.f32 %v956, 1e-05
  %v962 = vrsqrt.pop %v961
  %v963 = vmul.f32 %v957, %v962
  %v964 = vmul.f32 %v958, %v962
  %v965 = vmul.f32 %v959, %v962
  %v966 = vmul.f32 %v960, %v962
  %v967 = vld [vmem:[%s15] sm:$0xff]
  %v968 = vld [vmem:[%s15 + $0x8] sm:$0xff]
  %v969 = vld [vmem:[%s15 + $0x10] sm:$0xff]
  %v970 = vld [vmem:[%s15 + $0x18] sm:$0xff]
  %v971 = vld [vmem:[%s16] sm:$0xff]
  %v972 = vld [vmem:[%s16 + $0x8] sm:$0xff]
  %v973 = vld [vmem:[%s16 + $0x10] sm:$0xff]
  %v974 = vld [vmem:[%s16 + $0x18] sm:$0xff]
  %v976 = vsel %vm97, %v971, 0
  %v979 = vsel %vm97, %v972, 0
  %v982 = vsel %vm97, %v973, 0
  %v985 = vsel %vm97, %v974, 0
  %987 = vmatprep.subr.mxu0 0.0
  %988 = vmatpush1.msra.mxu0 %v478
  %989 = vmatprep.subr.mxu0 0.0
  %990 = vmatpush1.msra.mxu0 %v483
  %991 = vmatprep.subr.mxu0 0.0
  %992 = vmatpush1.msra.mxu0 0.0
  %993 = vmatprep.subr.mxu0 0.0
  %994 = vmatpush1.msra.mxu0 0.0
  %995 = vmatprep.subr.mxu0 0.0
  %996 = vmatpush1.msra.mxu0 0.0
  %997 = vmatprep.subr.mxu0 0.0
  %998 = vmatpush1.msra.mxu0 0.0
  %999 = vmatprep.subr.mxu0 0.0
  %1000 = vmatpush1.msra.mxu0 0.0
  %1001 = vmatprep.subr.mxu0 0.0
  %1002 = vmatpush1.msra.mxu0 0.0
  %1003 = vmatprep.subr.mxu0 0.0
  %1004 = vmatpush1.msra.mxu0 0.0
  %1005 = vmatprep.subr.mxu0 0.0
  %1006 = vmatpush1.msra.mxu0 0.0
  %1007 = vmatprep.subr.mxu0 0.0
  %1008 = vmatpush1.msra.mxu0 0.0
  %1009 = vmatprep.subr.mxu0 0.0
  %1010 = vmatpush1.msra.mxu0 0.0
  %1011 = vmatprep.subr.mxu0 0.0
  %1012 = vmatpush1.msra.mxu0 0.0
  %1013 = vmatprep.subr.mxu0 0.0
  %1014 = vmatpush1.msra.mxu0 0.0
  %1015 = vmatprep.subr.mxu0 0.0
  %1016 = vmatpush1.msra.mxu0 0.0
  %1017 = vmatprep.subr.mxu0 0.0
  %1018 = vmatpush1.msra.mxu0 0.0
  %1019 = vmatprep.subr.mxu0 0.0
  %1020 = vmatpush1.msra.mxu0 0.0
  %1021 = vmatprep.subr.mxu0 0.0
  %1022 = vmatpush1.msra.mxu0 0.0
  %1023 = vmatprep.subr.mxu0 0.0
  %1024 = vmatpush1.msra.mxu0 0.0
  %1025 = vmatprep.subr.mxu0 0.0
  %1026 = vmatpush1.msra.mxu0 0.0
  %1027 = vmatprep.subr.mxu0 0.0
  %1028 = vmatpush1.msra.mxu0 0.0
  %1029 = vmatprep.subr.mxu0 0.0
  %1030 = vmatpush1.msra.mxu0 0.0
  %1031 = vmatprep.subr.mxu0 0.0
  %1032 = vmatpush1.msra.mxu0 0.0
  %1033 = vmatprep.subr.mxu0 0.0
  %1034 = vmatpush1.msra.mxu0 0.0
  %1035 = vmatprep.subr.mxu0 0.0
  %1036 = vmatpush1.msra.mxu0 0.0
  %1037 = vmatprep.subr.mxu0 0.0
  %1038 = vmatpush1.msra.mxu0 0.0
  %1039 = vmatprep.subr.mxu0 0.0
  %1040 = vmatpush1.msra.mxu0 0.0
  %1041 = vmatprep.subr.mxu0 0.0
  %1042 = vmatpush1.msra.mxu0 0.0
  %1043 = vmatprep.subr.mxu0 0.0
  %1044 = vmatpush1.msra.mxu0 0.0
  %1045 = vmatprep.subr.mxu0 0.0
  %1046 = vmatpush1.msra.mxu0 0.0
  %1047 = vmatprep.subr.mxu0 0.0
  %1048 = vmatpush1.msra.mxu0 0.0
  %1049 = vmatprep.subr.mxu0 0.0
  %1050 = vmatpush1.msra.mxu0 0.0
  %1051 = vmatprep.mubr.f32.mxu0 0.0
  %1052 = vmatmul.mubr.f32.gmra.mrb[0].mxu0 %v976
  %v1053 = vpop.f32.mrb[0].mxu0
  %v1054 = vadd.f32 0.0, %v1053
  %v1055 = vpop.f32.mrb[0].mxu0
  %1056 = vmatprep.mubr.f32.mxu0 0.0
  %1057 = vmatmul.mubr.f32.gmra.mrb[0].mxu0 %v979
  %v1058 = vpop.f32.mrb[0].mxu0
  %v1059 = vadd.f32 0.0, %v1058
  %v1060 = vpop.f32.mrb[0].mxu0
  %1061 = vmatprep.mubr.f32.mxu0 0.0
  %1062 = vmatmul.mubr.f32.gmra.mrb[0].mxu0 %v982
  %v1063 = vpop.f32.mrb[0].mxu0
  %v1064 = vadd.f32 0.0, %v1063
  %v1065 = vpop.f32.mrb[0].mxu0
  %1066 = vmatprep.mubr.f32.mxu0 0.0
  %1067 = vmatmul.mubr.f32.gmra.mrb[0].mxu0 %v985
  %v1068 = vpop.f32.mrb[0].mxu0
  %v1069 = vadd.f32 0.0, %v1068
  %v1070 = vpop.f32.mrb[0].mxu0
  %1071 = vdwg.mxu0
  %v1073 = vsel %vm307, %v967, 0
  %v1076 = vsel %vm307, %v968, 0
  %v1079 = vsel %vm307, %v969, 0
  %v1082 = vsel %vm307, %v970, 0
  %1084 = vmatprep.subr.mxu0 0.0
  %1085 = vmatpush1.msra.mxu0 %v963
  %1086 = vmatprep.subr.mxu0 0.0
  %1087 = vmatpush1.msra.mxu0 %v964
  %1088 = vmatprep.subr.mxu0 0.0
  %1089 = vmatpush1.msra.mxu0 %v965
  %1090 = vmatprep.subr.mxu0 0.0
  %1091 = vmatpush1.msra.mxu0 %v966
  %1092 = vmatprep.subr.mxu0 0.0
  %1093 = vmatpush1.msra.mxu0 0.0
  %1094 = vmatprep.subr.mxu0 0.0
  %1095 = vmatpush1.msra.mxu0 0.0
  %1096 = vmatprep.subr.mxu0 0.0
  %1097 = vmatpush1.msra.mxu0 0.0
  %1098 = vmatprep.subr.mxu0 0.0
  %1099 = vmatpush1.msra.mxu0 0.0
  %1100 = vmatprep.subr.mxu0 0.0
  %1101 = vmatpush1.msra.mxu0 0.0
  %1102 = vmatprep.subr.mxu0 0.0
  %1103 = vmatpush1.msra.mxu0 0.0
  %1104 = vmatprep.subr.mxu0 0.0
  %1105 = vmatpush1.msra.mxu0 0.0
  %1106 = vmatprep.subr.mxu0 0.0
  %1107 = vmatpush1.msra.mxu0 0.0
  %1108 = vmatprep.subr.mxu0 0.0
  %1109 = vmatpush1.msra.mxu0 0.0
  %1110 = vmatprep.subr.mxu0 0.0
  %1111 = vmatpush1.msra.mxu0 0.0
  %1112 = vmatprep.subr.mxu0 0.0
  %1113 = vmatpush1.msra.mxu0 0.0
  %1114 = vmatprep.subr.mxu0 0.0
  %1115 = vmatpush1.msra.mxu0 0.0
  %1116 = vmatprep.subr.mxu0 0.0
  %1117 = vmatpush1.msra.mxu0 0.0
  %1118 = vmatprep.subr.mxu0 0.0
  %1119 = vmatpush1.msra.mxu0 0.0
  %1120 = vmatprep.subr.mxu0 0.0
  %1121 = vmatpush1.msra.mxu0 0.0
  %1122 = vmatprep.subr.mxu0 0.0
  %1123 = vmatpush1.msra.mxu0 0.0
  %1124 = vmatprep.subr.mxu0 0.0
  %1125 = vmatpush1.msra.mxu0 0.0
  %1126 = vmatprep.subr.mxu0 0.0
  %1127 = vmatpush1.msra.mxu0 0.0
  %1128 = vmatprep.subr.mxu0 0.0
  %1129 = vmatpush1.msra.mxu0 0.0
  %1130 = vmatprep.subr.mxu0 0.0
  %1131 = vmatpush1.msra.mxu0 0.0
  %1132 = vmatprep.subr.mxu0 0.0
  %1133 = vmatpush1.msra.mxu0 0.0
  %1134 = vmatprep.subr.mxu0 0.0
  %1135 = vmatpush1.msra.mxu0 0.0
  %1136 = vmatprep.subr.mxu0 0.0
  %1137 = vmatpush1.msra.mxu0 0.0
  %1138 = vmatprep.subr.mxu0 0.0
  %1139 = vmatpush1.msra.mxu0 0.0
  %1140 = vmatprep.subr.mxu0 0.0
  %1141 = vmatpush1.msra.mxu0 0.0
  %1142 = vmatprep.subr.mxu0 0.0
  %1143 = vmatpush1.msra.mxu0 0.0
  %1144 = vmatprep.subr.mxu0 0.0
  %1145 = vmatpush1.msra.mxu0 0.0
  %1146 = vmatprep.subr.mxu0 0.0
  %1147 = vmatpush1.msra.mxu0 0.0
  %1148 = vmatprep.mubr.f32.mxu0 0.0
  %1149 = vmatmul.mubr.f32.gmra.mrb[0].mxu0 %v1073
  %v1150 = vpop.f32.mrb[0].mxu0
  %v1151 = vadd.f32 %v1054, %v1150
  %v1152 = vpop.f32.mrb[0].mxu0
  %1153 = vmatprep.mubr.f32.mxu0 0.0
  %1154 = vmatmul.mubr.f32.gmra.mrb[0].mxu0 %v1076
  %v1155 = vpop.f32.mrb[0].mxu0
  %v1156 = vadd.f32 %v1059, %v1155
  %v1157 = vpop.f32.mrb[0].mxu0
  %1158 = vmatprep.mubr.f32.mxu0 0.0
  %1159 = vmatmul.mubr.f32.gmra.mrb[0].mxu0 %v1079
  %v1160 = vpop.f32.mrb[0].mxu0
  %v1161 = vadd.f32 %v1064, %v1160
  %v1162 = vpop.f32.mrb[0].mxu0
  %1163 = vmatprep.mubr.f32.mxu0 0.0
  %1164 = vmatmul.mubr.f32.gmra.mrb[0].mxu0 %v1082
  %v1165 = vpop.f32.mrb[0].mxu0
  %v1166 = vadd.f32 %v1069, %v1165
  %v1167 = vpop.f32.mrb[0].mxu0
  %1168 = vdwg.mxu0
  %v1169 = vld [vmem:[%s17] sm:$0xff]
  %v1170 = vld [vmem:[%s17 + $0x8] sm:$0xff]
  %v1171 = vld [vmem:[%s17 + $0x10] sm:$0xff]
  %v1172 = vld [vmem:[%s17 + $0x18] sm:$0xff]
  %1174 = vset.pattern.permute.xlu0 0
  %1175 = vperm.xlu0 %1174, %v1169
  %v1176 = vpop.permute.xlu0 %1175
  %1179 = vset.pattern.permute.xlu0 0
  %1180 = vperm.xlu0 %1179, %v1170
  %v1181 = vpop.permute.xlu0 %1180
  %1184 = vset.pattern.permute.xlu0 0
  %1185 = vperm.xlu0 %1184, %v1171
  %v1186 = vpop.permute.xlu0 %1185
  %1189 = vset.pattern.permute.xlu0 0
  %1190 = vperm.xlu0 %1189, %v1172
  %v1191 = vpop.permute.xlu0 %1190
  %v1193 = vadd.f32 %v1151, %v1176
  %v1194 = vadd.f32 %v1156, %v1181
  %v1195 = vadd.f32 %v1161, %v1186
  %v1196 = vadd.f32 %v1166, %v1191
  %v1197 = vmax.f32 %v1193, 0.0
  %v1198 = vmax.f32 %v1194, 0.0
  %v1199 = vmax.f32 %v1195, 0.0
  %v1200 = vmax.f32 %v1196, 0.0
  %v1201 = vld [vmem:[%s18] sm:$0xff]
  %v1202 = vld [vmem:[%s18 + $0x8] sm:$0xff]
  %v1203 = vld [vmem:[%s18 + $0x10] sm:$0xff]
  %v1204 = vld [vmem:[%s18 + $0x18] sm:$0xff]
  %1206 = vset.pattern.permute.xlu0 0
  %1207 = vperm.xlu0 %1206, %v1201
  %v1208 = vpop.permute.xlu0 %1207
  %1211 = vset.pattern.permute.xlu0 0
  %1212 = vperm.xlu0 %1211, %v1202
  %v1213 = vpop.permute.xlu0 %1212
  %1216 = vset.pattern.permute.xlu0 0
  %1217 = vperm.xlu0 %1216, %v1203
  %v1218 = vpop.permute.xlu0 %1217
  %1221 = vset.pattern.permute.xlu0 0
  %1222 = vperm.xlu0 %1221, %v1204
  %v1223 = vpop.permute.xlu0 %1222
  %v1225 = vmul.f32 %v1197, %v1208
  %v1226 = vmul.f32 %v1198, %v1213
  %v1227 = vmul.f32 %v1199, %v1218
  %v1228 = vmul.f32 %v1200, %v1223
  %v1229 = vadd.f32 %v1225, %v1226
  %v1230 = vadd.f32 %v1229, %v1227
  %v1231 = vadd.f32 %v1230, %v1228
  %v1232 = vrot.slane %v1231, 4
  %v1233 = vadd.f32 %v1231, %v1232
  %v1234 = vrot.slane %v1233, 2
  %v1235 = vadd.f32 %v1233, %v1234
  %v1236 = vrot.slane %v1235, 1
  %v1237 = vadd.f32 %v1235, %v1236
  %v1238 = vld [vmem:[#allocation2] sm:$0x1]
  %1240 = vset.pattern.permute.xlu0 0
  %1241 = vperm.xlu0 %1240, %v1238
  %v1242 = vpop.permute.xlu0 %1241
  %v1244 = vlaneseq
  %v1245 = vshrl.u32 %v1244, 7
  %v1246 = vsub.s32 0, %v1245
  %v1247 = vrot.slane %v1242, %v1246
  %v1248 = vadd.f32 %v1237, %v1247
  %1249 = vst [vmem:[%s20] sm:$0x1] %v1248
  // Predicated region
  $region82: #{transformer_predictor.1} parent=0 // pred_check
    _
  $region83: #{transformer_predictor.1} parent=0 // pred_check_branch
    %1251 = sbr.rel (0) target = $region85
  $region84: #{transformer_predictor.1} parent=0 // pred_region
    _
  $region85: #{transformer_predictor.1} parent=0 // pred_fallthru
    _
  // Predicated region
  $region86: #{transformer_predictor.1} parent=0 // pred_check
    _
  $region87: #{transformer_predictor.1} parent=0 // pred_check_branch
    %1253 = sbr.rel (0) target = $region89
  $region88: #{transformer_predictor.1} parent=0 // pred_region
    _
  $region89: #{transformer_predictor.1} parent=0 // pred_fallthru
    _

</llo_original>
